<compile_context>
chip_gen: v6e
topology: v6e:2x2x1
jax: 0.10.0
libtpu: 0.0.40
codegen_flags: <defaults>
</compile_context>

<pallas_src>
from functools import partial

import jax
import jax.numpy as jnp
from jax import lax
from jax.experimental import pallas as pl
from jax.experimental.pallas import tpu as pltpu

_LANE = 128
_SUBLANE = 8
_UNROLL_LIMIT = 16          # fully unroll the recurrence up to this many steps


def _round_up(x, m):
    return ((x + m - 1) // m) * m


def char_decoder_kernel(x_ref, h0_ref, c0_ref, w_ih_t_ref, b_gate_ref,
                        w_hh_t_ref, w_out_t_ref, b_out_ref,
                        scores_ref, h_out_ref, c_out_ref,
                        pre_scr, h_all_scr):
    """Single-grid-point kernel: input matmul + LSTM recurrence + projection.

    x_ref       : (L, Bp, Ep)  f32  embedded inputs (zero-padded)
    h0/c0       : (Bp, Hp)     f32  initial state (zero-padded)
    w_ih_t_ref  : (Ep, 4*Hp)   f32  W_ih^T (gate-major, zero-padded)
    b_gate_ref  : (1, 4*Hp)    f32  b_ih + b_hh
    w_hh_t_ref  : (Hp, 4*Hp)   f32  W_hh^T
    w_out_t_ref : (Hp, Vp)     f32  W_out^T
    b_out_ref   : (1, Vp)      f32
    scores_ref  : (L, Bp, Vp)  f32  lane-dense output
    h/c_out_ref : (Bp, Hp)     f32  final state
    pre_scr     : (L, Bp, 4Hp) f32  VMEM scratch: pre-computed input gates
    h_all_scr   : (L, Bp, Hp)  f32  VMEM scratch: every h_t
    """
    L, Bp, Ep = x_ref.shape
    Hp = w_hh_t_ref.shape[0]
    Vp = scores_ref.shape[-1]
    G = 4 * Hp

    # ---- prologue: batched input-gate matmul (no sequential dependence) ----
    # One (L*Bp, Ep) x (Ep, 4Hp) MXU matmul instead of L tiny per-step matmuls
    # or a separate XLA launch + HBM round trip.
    x_flat = x_ref[...].reshape(L * Bp, Ep)
    pre = jnp.dot(x_flat, w_ih_t_ref[...],
                  preferred_element_type=jnp.float32) + b_gate_ref[...]
    pre_scr[...] = pre.reshape(L, Bp, G)

    w_hh_t = w_hh_t_ref[...]            # loaded once; VMEM-resident for the loop

    def step(t, h, c):
        gates = pre_scr[t] + jnp.dot(h, w_hh_t,
                                     preferred_element_type=jnp.float32)
        # Hp is a multiple of 128 -> every gate slice is lane-aligned (free).
        i_g = jax.nn.sigmoid(gates[:, 0 * Hp:1 * Hp])
        f_g = jax.nn.sigmoid(gates[:, 1 * Hp:2 * Hp])
        g_g = jnp.tanh(gates[:, 2 * Hp:3 * Hp])
        o_g = jax.nn.sigmoid(gates[:, 3 * Hp:4 * Hp])
        c_new = f_g * c + i_g * g_g
        h_new = o_g * jnp.tanh(c_new)
        h_all_scr[t] = h_new
        return h_new, c_new

    if L <= _UNROLL_LIMIT:
        # Fully unrolled: h/c stay in vregs, scheduler sees the whole chain.
        h = h0_ref[...]
        c = c0_ref[...]
        for t in range(L):
            h, c = step(t, h, c)
        h_out_ref[...] = h
        c_out_ref[...] = c
    else:
        # Capped unroll for long sequences: sequential in-kernel loop with the
        # carry parked in the (VMEM-resident) output refs -> bounded vreg
        # pressure and code size, still a single grid point / single weight DMA.
        h_out_ref[...] = h0_ref[...]
        c_out_ref[...] = c0_ref[...]

        @pl.loop(0, L)
        def _(t):
            h_new, c_new = step(t, h_out_ref[...], c_out_ref[...])
            h_out_ref[...] = h_new
            c_out_ref[...] = c_new

    # ---- epilogue: batched output projection --------------------------------
    # ONE (L*Bp, Hp) x (Hp, Vp) MXU matmul; store is lane-dense (Vp % 128 == 0).
    h_all = h_all_scr[...].reshape(L * Bp, Hp)
    scores = (jnp.dot(h_all, w_out_t_ref[...],
                      preferred_element_type=jnp.float32) + b_out_ref[...])
    scores_ref[...] = scores.reshape(L, Bp, Vp)


def prepare_params(params):
    """One-time weight preprocessing.  Call ONCE; reuse the result per forward.

    Pads to MXU/lane-friendly sizes and pre-transposes every weight so the
    per-call wrapper does zero weight work.
    """
    emb = params["embedding"].astype(jnp.float32)                 # (V, E)
    w_ih = params["w_ih"].astype(jnp.float32)                     # (4H, E)
    w_hh = params["w_hh"].astype(jnp.float32)                     # (4H, H)
    b = (params["b_ih"] + params["b_hh"]).astype(jnp.float32)     # (4H,)
    w_out = params["w_out"].astype(jnp.float32)                   # (V, H)
    b_out = params["b_out"].astype(jnp.float32)                   # (V,)

    V, E = emb.shape
    H = w_hh.shape[1]
    Hp = _round_up(H, _LANE)
    Vp = _round_up(V, _LANE)
    Ep = _round_up(E, _LANE)

    # Padded hidden units get zero input/recurrent/output columns and zero bias,
    # so (with zero-padded h0/c0) they stay exactly 0 through the recurrence.
    emb_p = jnp.pad(emb, ((0, 0), (0, Ep - E)))                   # (V, Ep)

    w_ih_g = jnp.pad(w_ih.reshape(4, H, E), ((0, 0), (0, Hp - H), (0, Ep - E)))
    w_ih_t = w_ih_g.reshape(4 * Hp, Ep).T                         # (Ep, 4Hp)

    w_hh_g = jnp.pad(w_hh.reshape(4, H, H), ((0, 0), (0, Hp - H), (0, Hp - H)))
    w_hh_t = w_hh_g.reshape(4 * Hp, Hp).T                         # (Hp, 4Hp)

    b_gate = jnp.pad(b.reshape(4, H), ((0, 0), (0, Hp - H))).reshape(1, 4 * Hp)

    w_out_t = jnp.pad(w_out, ((0, Vp - V), (0, Hp - H))).T        # (Hp, Vp)
    b_out_p = jnp.pad(b_out, (0, Vp - V)).reshape(1, Vp)          # (1, Vp)

    prep = {
        "emb_p": emb_p, "w_ih_t": w_ih_t, "b_gate": b_gate,
        "w_hh_t": w_hh_t, "w_out_t": w_out_t, "b_out": b_out_p,
        "H": H, "V": V, "E": E,
    }
    # Force materialization now so no forward call ever re-runs this graph.
    jax.block_until_ready([v for v in prep.values() if isinstance(v, jax.Array)])
    return prep


@partial(jax.jit, static_argnames=("H", "V"))
def _char_decoder_forward_impl(input_ids, emb_p, w_ih_t, b_gate, w_hh_t,
                               w_out_t, b_out_p, h0, c0, *, H, V):
    """Everything per-call (gather, pads, pallas_call, de-pad slices) in ONE jit."""
    L, B = input_ids.shape
    Ep = emb_p.shape[1]
    Hp = w_hh_t.shape[0]
    Vp = w_out_t.shape[1]
    Bp = _round_up(B, _SUBLANE)

    # Embedding gather on padded batch; padded batch rows are independent and
    # get sliced off at the end.
    ids_pad = jnp.pad(input_ids, ((0, 0), (0, Bp - B)))           # (L, Bp)
    x_emb = jnp.take(emb_p, ids_pad, axis=0)                      # (L, Bp, Ep)

    if h0 is None:
        h0_pad = jnp.zeros((Bp, Hp), jnp.float32)
        c0_pad = jnp.zeros((Bp, Hp), jnp.float32)
    else:
        h0_pad = jnp.pad(h0[0].astype(jnp.float32), ((0, Bp - B), (0, Hp - H)))
        c0_pad = jnp.pad(c0[0].astype(jnp.float32), ((0, Bp - B), (0, Hp - H)))

    grid_spec = pltpu.PrefetchScalarGridSpec(
        num_scalar_prefetch=0,
        grid=(1,),                                   # whole recurrence in-kernel
        in_specs=[
            pl.BlockSpec((L, Bp, Ep), lambda i: (0, 0, 0)),       # x_emb
            pl.BlockSpec((Bp, Hp), lambda i: (0, 0)),             # h0
            pl.BlockSpec((Bp, Hp), lambda i: (0, 0)),             # c0
            pl.BlockSpec((Ep, 4 * Hp), lambda i: (0, 0)),         # W_ih^T
            pl.BlockSpec((1, 4 * Hp), lambda i: (0, 0)),          # b_ih + b_hh
            pl.BlockSpec((Hp, 4 * Hp), lambda i: (0, 0)),         # W_hh^T
            pl.BlockSpec((Hp, Vp), lambda i: (0, 0)),             # W_out^T
            pl.BlockSpec((1, Vp), lambda i: (0, 0)),              # b_out
        ],
        out_specs=[
            pl.BlockSpec((L, Bp, Vp), lambda i: (0, 0, 0)),       # padded scores
            pl.BlockSpec((Bp, Hp), lambda i: (0, 0)),             # final h
            pl.BlockSpec((Bp, Hp), lambda i: (0, 0)),             # final c
        ],
        scratch_shapes=[
            pltpu.VMEM((L, Bp, 4 * Hp), jnp.float32),             # pre-gates
            pltpu.VMEM((L, Bp, Hp), jnp.float32),                 # all h_t
        ],
    )

    scores_pad, h_n, c_n = pl.pallas_call(
        char_decoder_kernel,
        out_shape=(
            jax.ShapeDtypeStruct((L, Bp, Vp), jnp.float32),
            jax.ShapeDtypeStruct((Bp, Hp), jnp.float32),
            jax.ShapeDtypeStruct((Bp, Hp), jnp.float32),
        ),
        grid_spec=grid_spec,
        compiler_params=pltpu.CompilerParams(
            dimension_semantics=("arbitrary",),      # LSTM recurrence is serial
        ),
    )(x_emb, h0_pad, c0_pad, w_ih_t, b_gate, w_hh_t, w_out_t, b_out_p)

    # De-pad inside the same jit so these are fused slices, not extra dispatches.
    scores = scores_pad[:, :B, :V]
    h_out = h_n[None, :B, :H]
    c_out = c_n[None, :B, :H]
    return scores, (h_out, c_out)


def char_decoder_forward(input_ids, prep, dec_hidden=None):
    """Pallas implementation of CharDecoder.forward.

    input_ids : (L, B) int32
    prep      : output of prepare_params(params)  (cached, call once)
    returns   : scores (L, B, V) f32, (h, c) each (1, B, H) f32
    """
    if dec_hidden is None:
        h0 = c0 = None
    else:
        h0, c0 = dec_hidden
    return _char_decoder_forward_impl(
        input_ids, prep["emb_p"], prep["w_ih_t"], prep["b_gate"],
        prep["w_hh_t"], prep["w_out_t"], prep["b_out"], h0, c0,
        H=prep["H"], V=prep["V"])


def char_decoder_forward_ref(input_ids, params, dec_hidden=None):
    """Pure-JAX reference matching torch nn.LSTM + nn.Linear semantics (f32)."""
    emb = params["embedding"]
    w_ih, w_hh = params["w_ih"], params["w_hh"]
    b = params["b_ih"] + params["b_hh"]
    w_out, b_out = params["w_out"], params["b_out"]
    L, B = input_ids.shape
    H = w_hh.shape[1]
    if dec_hidden is None:
        h0 = jnp.zeros((1, B, H), jnp.float32)
        c0 = jnp.zeros((1, B, H), jnp.float32)
    else:
        h0, c0 = dec_hidden
    x_emb = jnp.take(emb, input_ids, axis=0)
    # Full-precision matmuls so the reference really is an f32 reference.
    pre = jnp.dot(x_emb, w_ih.T, precision=lax.Precision.HIGHEST) + b  # (L,B,4H)

    def step(carry, xg):
        h, c = carry
        gates = xg + jnp.dot(h, w_hh.T, precision=lax.Precision.HIGHEST)
        i, f, g, o = jnp.split(gates, 4, axis=-1)
        i, f, o = jax.nn.sigmoid(i), jax.nn.sigmoid(f), jax.nn.sigmoid(o)
        g = jnp.tanh(g)
        c = f * c + i * g
        h = o * jnp.tanh(c)
        return (h, c), h

    (h_n, c_n), hs = lax.scan(step, (h0[0], c0[0]), pre)
    scores = jnp.dot(hs, w_out.T, precision=lax.Precision.HIGHEST) + b_out
    return scores, (h_n[None], c_n[None])


def init_params(key, vocab_size, char_embedding_size, hidden_size, pad_idx):
    ks = jax.random.split(key, 7)
    H, E, V = hidden_size, char_embedding_size, vocab_size
    scale = 0.1
    emb = scale * jax.random.normal(ks[0], (V, E), jnp.float32)
    emb = emb.at[pad_idx].set(0.0)   # padding_idx row is zero in nn.Embedding
    return {
        "embedding": emb,
        "w_ih": scale * jax.random.normal(ks[1], (4 * H, E), jnp.float32),
        "w_hh": scale * jax.random.normal(ks[2], (4 * H, H), jnp.float32),
        "b_ih": scale * jax.random.normal(ks[3], (4 * H,), jnp.float32),
        "b_hh": scale * jax.random.normal(ks[4], (4 * H,), jnp.float32),
        "w_out": scale * jax.random.normal(ks[5], (V, H), jnp.float32),
        "b_out": scale * jax.random.normal(ks[6], (V,), jnp.float32),
    }


if __name__ == "__main__":
    key = jax.random.PRNGKey(0)
    hidden_size = 32
    char_embedding_size = 50
    vocab_size = 30             # len(target_vocab.char2id)
    pad_idx = 0

    k_param, k_ids, k_h, k_c, k_ids2 = jax.random.split(key, 5)
    params = init_params(k_param, vocab_size, char_embedding_size, hidden_size,
                         pad_idx)
    prep = prepare_params(params)     # one-time, cached weight preprocessing

    # --- case 1: short sequence (fully unrolled recurrence), given dec_hidden ---
    L, B = 8, 2
    input_ids = jax.random.randint(k_ids, (L, B), 0, vocab_size, jnp.int32)
    h0 = 0.1 * jax.random.normal(k_h, (1, B, hidden_size), jnp.float32)
    c0 = 0.1 * jax.random.normal(k_c, (1, B, hidden_size), jnp.float32)

    scores, (h_n, c_n) = char_decoder_forward(input_ids, prep, (h0, c0))
    jax.block_until_ready((scores, h_n, c_n))
    scores_ref, (h_ref, c_ref) = char_decoder_forward_ref(input_ids, params,
                                                          (h0, c0))
    assert scores.shape == (L, B, vocab_size)
    assert h_n.shape == (1, B, hidden_size) and c_n.shape == (1, B, hidden_size)
    assert jnp.allclose(scores, scores_ref, atol=1e-5, rtol=1e-5)
    assert jnp.allclose(h_n, h_ref, atol=1e-5, rtol=1e-5)
    assert jnp.allclose(c_n, c_ref, atol=1e-5, rtol=1e-5)

    # --- case 2: dec_hidden=None (zero initial state) path ---
    scores0, (h0n, c0n) = char_decoder_forward(input_ids, prep, None)
    jax.block_until_ready((scores0, h0n, c0n))
    scores0_ref, (h0_ref, c0_ref) = char_decoder_forward_ref(input_ids, params,
                                                             None)
    assert jnp.allclose(scores0, scores0_ref, atol=1e-5, rtol=1e-5)
    assert jnp.allclose(h0n, h0_ref, atol=1e-5, rtol=1e-5)
    assert jnp.allclose(c0n, c0_ref, atol=1e-5, rtol=1e-5)

    # --- case 3: longer sequence -> exercises the capped-unroll (pl.loop) path ---
    L2 = 24
    input_ids2 = jax.random.randint(k_ids2, (L2, B), 0, vocab_size, jnp.int32)
    scores2, (h2, c2) = char_decoder_forward(input_ids2, prep, (h0, c0))
    jax.block_until_ready((scores2, h2, c2))
    scores2_ref, (h2_ref, c2_ref) = char_decoder_forward_ref(input_ids2, params,
                                                             (h0, c0))
    assert scores2.shape == (L2, B, vocab_size)
    assert jnp.allclose(scores2, scores2_ref, atol=1e-5, rtol=1e-5)
    assert jnp.allclose(h2, h2_ref, atol=1e-5, rtol=1e-5)
    assert jnp.allclose(c2, c2_ref, atol=1e-5, rtol=1e-5)

    # TODO(synk): decode_greedy's Python string assembly / vocab id->char lookup
    # and train_forward's CrossEntropyLoss are host-side / loss logic with no
    # Pallas equivalent; only the tensor forward pass is implemented.
    print("KERNEL_OK")
</pallas_src>

<mosaic_0001>
module attributes {stable_mosaic.version = 11 : i64} {
  func.func @char_decoder_kernel(%arg0: i32, %arg1: memref<8x8x128xf32, #tpu.memory_space<vmem>>, %arg2: memref<8x128xf32, #tpu.memory_space<vmem>>, %arg3: memref<8x128xf32, #tpu.memory_space<vmem>>, %arg4: memref<128x512xf32, #tpu.memory_space<vmem>>, %arg5: memref<1x512xf32, #tpu.memory_space<vmem>>, %arg6: memref<128x512xf32, #tpu.memory_space<vmem>>, %arg7: memref<128x128xf32, #tpu.memory_space<vmem>>, %arg8: memref<1x128xf32, #tpu.memory_space<vmem>>, %arg9: memref<8x8x128xf32, #tpu.memory_space<vmem>>, %arg10: memref<8x128xf32, #tpu.memory_space<vmem>>, %arg11: memref<8x128xf32, #tpu.memory_space<vmem>>, %arg12: memref<8x8x512xf32, #tpu.memory_space<vmem>>, %arg13: memref<8x8x128xf32, #tpu.memory_space<vmem>>) attributes {dimension_semantics = [#tpu.dimension_semantics<arbitrary>], iteration_bounds = array<i64: 1>, scalar_prefetch = 0 : i64, scratch_operands = 2 : i64, tpu.core_type = #tpu.core_type<tc>, window_params = [{pipeline_mode = #tpu.pipeline_mode<synchronous>, transform_indices = @transform_0, window_bounds = array<i64: 8, 8, 128>}, {pipeline_mode = #tpu.pipeline_mode<synchronous>, transform_indices = @transform_1, window_bounds = array<i64: 8, 128>}, {pipeline_mode = #tpu.pipeline_mode<synchronous>, transform_indices = @transform_2, window_bounds = array<i64: 8, 128>}, {pipeline_mode = #tpu.pipeline_mode<synchronous>, transform_indices = @transform_3, window_bounds = array<i64: 128, 512>}, {pipeline_mode = #tpu.pipeline_mode<synchronous>, transform_indices = @transform_4, window_bounds = array<i64: 1, 512>}, {pipeline_mode = #tpu.pipeline_mode<synchronous>, transform_indices = @transform_5, window_bounds = array<i64: 128, 512>}, {pipeline_mode = #tpu.pipeline_mode<synchronous>, transform_indices = @transform_6, window_bounds = array<i64: 128, 128>}, {pipeline_mode = #tpu.pipeline_mode<synchronous>, transform_indices = @transform_7, window_bounds = array<i64: 1, 128>}, {pipeline_mode = #tpu.pipeline_mode<synchronous>, transform_indices = @transform_8, window_bounds = array<i64: 8, 8, 128>}, {pipeline_mode = #tpu.pipeline_mode<synchronous>, transform_indices = @transform_9, window_bounds = array<i64: 8, 128>}, {pipeline_mode = #tpu.pipeline_mode<synchronous>, transform_indices = @transform_10, window_bounds = array<i64: 8, 128>}]} {
    %c0 = arith.constant 0 : index
    %c0_0 = arith.constant 0 : index
    %c0_1 = arith.constant 0 : index
    %0 = vector.load %arg1[%c0, %c0_0, %c0_1] : memref<8x8x128xf32, #tpu.memory_space<vmem>>, vector<8x8x128xf32>
    %1 = vector.shape_cast %0 : vector<8x8x128xf32> to vector<64x128xf32>
    %c0_2 = arith.constant 0 : index
    %c0_3 = arith.constant 0 : index
    %2 = vector.load %arg4[%c0_2, %c0_3] : memref<128x512xf32, #tpu.memory_space<vmem>>, vector<128x512xf32>
    %cst = arith.constant dense<0.000000e+00> : vector<64x512xf32>
    %3 = tpu.matmul %1, %2, %cst {dimension_numbers = #tpu.dot_dimension_numbers<[1], [0], [0], [1], [0, 0, 1, 1], [], []>} : vector<64x128xf32>, vector<128x512xf32>, vector<64x512xf32> -> vector<64x512xf32>
    %c0_4 = arith.constant 0 : index
    %c0_5 = arith.constant 0 : index
    %4 = vector.load %arg5[%c0_4, %c0_5] : memref<1x512xf32, #tpu.memory_space<vmem>>, vector<1x512xf32>
    %5 = vector.broadcast %4 : vector<1x512xf32> to vector<64x512xf32>
    %6 = arith.addf %3, %5 : vector<64x512xf32>
    %7 = vector.shape_cast %6 : vector<64x512xf32> to vector<8x8x512xf32>
    %c0_6 = arith.constant 0 : index
    %c0_7 = arith.constant 0 : index
    %c0_8 = arith.constant 0 : index
    %8 = vector.load %arg12[%c0_6, %c0_7, %c0_8] : memref<8x8x512xf32, #tpu.memory_space<vmem>>, vector<8x8x512xf32>
    tpu.vector_store %arg12[%c0_6, %c0_7, %c0_8], %7 {strides = array<i32>} : memref<8x8x512xf32, #tpu.memory_space<vmem>>, vector<8x8x512xf32>,
    %c0_9 = arith.constant 0 : index
    %c0_10 = arith.constant 0 : index
    %9 = vector.load %arg6[%c0_9, %c0_10] : memref<128x512xf32, #tpu.memory_space<vmem>>, vector<128x512xf32>
    %c0_11 = arith.constant 0 : index
    %c0_12 = arith.constant 0 : index
    %10 = vector.load %arg2[%c0_11, %c0_12] : memref<8x128xf32, #tpu.memory_space<vmem>>, vector<8x128xf32>
    %c0_13 = arith.constant 0 : index
    %c0_14 = arith.constant 0 : index
    %11 = vector.load %arg3[%c0_13, %c0_14] : memref<8x128xf32, #tpu.memory_space<vmem>>, vector<8x128xf32>
    %c0_15 = arith.constant 0 : index
    %c0_16 = arith.constant 0 : index
    %c0_17 = arith.constant 0 : index
    %12 = vector.load %arg12[%c0_15, %c0_16, %c0_17] : memref<8x8x512xf32, #tpu.memory_space<vmem>>, vector<1x8x512xf32>
    %13 = vector.shape_cast %12 : vector<1x8x512xf32> to vector<8x512xf32>
    %cst_18 = arith.constant dense<0.000000e+00> : vector<8x512xf32>
    %14 = tpu.matmul %10, %9, %cst_18 {dimension_numbers = #tpu.dot_dimension_numbers<[1], [0], [0], [1], [0, 0, 1, 1], [], []>} : vector<8x128xf32>, vector<128x512xf32>, vector<8x512xf32> -> vector<8x512xf32>
    %15 = arith.addf %13, %14 : vector<8x512xf32>
    %16 = vector.extract_strided_slice %15 {offsets = [0, 0], sizes = [8, 128], strides = [1, 1]} : vector<8x512xf32> to vector<8x128xf32>
    %17 = arith.negf %16 : vector<8x128xf32>
    %18 = math.exp %17 : vector<8x128xf32>
    %cst_19 = arith.constant 1.000000e+00 : f32
    %19 = vector.broadcast %cst_19 : f32 to vector<8x128xf32>
    %20 = arith.addf %19, %18 : vector<8x128xf32>
    %21 = arith.divf %19, %20 : vector<8x128xf32>
    %22 = vector.extract_strided_slice %15 {offsets = [0, 128], sizes = [8, 128], strides = [1, 1]} : vector<8x512xf32> to vector<8x128xf32>
    %23 = arith.negf %22 : vector<8x128xf32>
    %24 = math.exp %23 : vector<8x128xf32>
    %cst_20 = arith.constant 1.000000e+00 : f32
    %25 = vector.broadcast %cst_20 : f32 to vector<8x128xf32>
    %26 = arith.addf %25, %24 : vector<8x128xf32>
    %27 = arith.divf %25, %26 : vector<8x128xf32>
    %28 = vector.extract_strided_slice %15 {offsets = [0, 256], sizes = [8, 128], strides = [1, 1]} : vector<8x512xf32> to vector<8x128xf32>
    %29 = math.tanh %28 : vector<8x128xf32>
    %30 = vector.extract_strided_slice %15 {offsets = [0, 384], sizes = [8, 128], strides = [1, 1]} : vector<8x512xf32> to vector<8x128xf32>
    %31 = arith.negf %30 : vector<8x128xf32>
    %32 = math.exp %31 : vector<8x128xf32>
    %cst_21 = arith.constant 1.000000e+00 : f32
    %33 = vector.broadcast %cst_21 : f32 to vector<8x128xf32>
    %34 = arith.addf %33, %32 : vector<8x128xf32>
    %35 = arith.divf %33, %34 : vector<8x128xf32>
    %36 = arith.mulf %27, %11 : vector<8x128xf32>
    %37 = arith.mulf %21, %29 : vector<8x128xf32>
    %38 = arith.addf %36, %37 : vector<8x128xf32>
    %39 = math.tanh %38 : vector<8x128xf32>
    %40 = arith.mulf %35, %39 : vector<8x128xf32>
    %c0_22 = arith.constant 0 : index
    %c0_23 = arith.constant 0 : index
    %c0_24 = arith.constant 0 : index
    %41 = vector.load %arg13[%c0_22, %c0_23, %c0_24] : memref<8x8x128xf32, #tpu.memory_space<vmem>>, vector<1x8x128xf32>
    %42 = vector.shape_cast %41 : vector<1x8x128xf32> to vector<8x128xf32>
    %43 = vector.shape_cast %40 : vector<8x128xf32> to vector<1x8x128xf32>
    tpu.vector_store %arg13[%c0_22, %c0_23, %c0_24], %43 {strides = array<i32>} : memref<8x8x128xf32, #tpu.memory_space<vmem>>, vector<1x8x128xf32>,
    %c1 = arith.constant 1 : index
    %c0_25 = arith.constant 0 : index
    %c0_26 = arith.constant 0 : index
    %44 = vector.load %arg12[%c1, %c0_25, %c0_26] : memref<8x8x512xf32, #tpu.memory_space<vmem>>, vector<1x8x512xf32>
    %45 = vector.shape_cast %44 : vector<1x8x512xf32> to vector<8x512xf32>
    %cst_27 = arith.constant dense<0.000000e+00> : vector<8x512xf32>
    %46 = tpu.matmul %40, %9, %cst_27 {dimension_numbers = #tpu.dot_dimension_numbers<[1], [0], [0], [1], [0, 0, 1, 1], [], []>} : vector<8x128xf32>, vector<128x512xf32>, vector<8x512xf32> -> vector<8x512xf32>
    %47 = arith.addf %45, %46 : vector<8x512xf32>
    %48 = vector.extract_strided_slice %47 {offsets = [0, 0], sizes = [8, 128], strides = [1, 1]} : vector<8x512xf32> to vector<8x128xf32>
    %49 = arith.negf %48 : vector<8x128xf32>
    %50 = math.exp %49 : vector<8x128xf32>
    %cst_28 = arith.constant 1.000000e+00 : f32
    %51 = vector.broadcast %cst_28 : f32 to vector<8x128xf32>
    %52 = arith.addf %51, %50 : vector<8x128xf32>
    %53 = arith.divf %51, %52 : vector<8x128xf32>
    %54 = vector.extract_strided_slice %47 {offsets = [0, 128], sizes = [8, 128], strides = [1, 1]} : vector<8x512xf32> to vector<8x128xf32>
    %55 = arith.negf %54 : vector<8x128xf32>
    %56 = math.exp %55 : vector<8x128xf32>
    %cst_29 = arith.constant 1.000000e+00 : f32
    %57 = vector.broadcast %cst_29 : f32 to vector<8x128xf32>
    %58 = arith.addf %57, %56 : vector<8x128xf32>
    %59 = arith.divf %57, %58 : vector<8x128xf32>
    %60 = vector.extract_strided_slice %47 {offsets = [0, 256], sizes = [8, 128], strides = [1, 1]} : vector<8x512xf32> to vector<8x128xf32>
    %61 = math.tanh %60 : vector<8x128xf32>
    %62 = vector.extract_strided_slice %47 {offsets = [0, 384], sizes = [8, 128], strides = [1, 1]} : vector<8x512xf32> to vector<8x128xf32>
    %63 = arith.negf %62 : vector<8x128xf32>
    %64 = math.exp %63 : vector<8x128xf32>
    %cst_30 = arith.constant 1.000000e+00 : f32
    %65 = vector.broadcast %cst_30 : f32 to vector<8x128xf32>
    %66 = arith.addf %65, %64 : vector<8x128xf32>
    %67 = arith.divf %65, %66 : vector<8x128xf32>
    %68 = arith.mulf %59, %38 : vector<8x128xf32>
    %69 = arith.mulf %53, %61 : vector<8x128xf32>
    %70 = arith.addf %68, %69 : vector<8x128xf32>
    %71 = math.tanh %70 : vector<8x128xf32>
    %72 = arith.mulf %67, %71 : vector<8x128xf32>
    %c1_31 = arith.constant 1 : index
    %c0_32 = arith.constant 0 : index
    %c0_33 = arith.constant 0 : index
    %73 = vector.load %arg13[%c1_31, %c0_32, %c0_33] : memref<8x8x128xf32, #tpu.memory_space<vmem>>, vector<1x8x128xf32>
    %74 = vector.shape_cast %73 : vector<1x8x128xf32> to vector<8x128xf32>
    %75 = vector.shape_cast %72 : vector<8x128xf32> to vector<1x8x128xf32>
    tpu.vector_store %arg13[%c1_31, %c0_32, %c0_33], %75 {strides = array<i32>} : memref<8x8x128xf32, #tpu.memory_space<vmem>>, vector<1x8x128xf32>,
    %c2 = arith.constant 2 : index
    %c0_34 = arith.constant 0 : index
    %c0_35 = arith.constant 0 : index
    %76 = vector.load %arg12[%c2, %c0_34, %c0_35] : memref<8x8x512xf32, #tpu.memory_space<vmem>>, vector<1x8x512xf32>
    %77 = vector.shape_cast %76 : vector<1x8x512xf32> to vector<8x512xf32>
    %cst_36 = arith.constant dense<0.000000e+00> : vector<8x512xf32>
    %78 = tpu.matmul %72, %9, %cst_36 {dimension_numbers = #tpu.dot_dimension_numbers<[1], [0], [0], [1], [0, 0, 1, 1], [], []>} : vector<8x128xf32>, vector<128x512xf32>, vector<8x512xf32> -> vector<8x512xf32>
    %79 = arith.addf %77, %78 : vector<8x512xf32>
    %80 = vector.extract_strided_slice %79 {offsets = [0, 0], sizes = [8, 128], strides = [1, 1]} : vector<8x512xf32> to vector<8x128xf32>
    %81 = arith.negf %80 : vector<8x128xf32>
    %82 = math.exp %81 : vector<8x128xf32>
    %cst_37 = arith.constant 1.000000e+00 : f32
    %83 = vector.broadcast %cst_37 : f32 to vector<8x128xf32>
    %84 = arith.addf %83, %82 : vector<8x128xf32>
    %85 = arith.divf %83, %84 : vector<8x128xf32>
    %86 = vector.extract_strided_slice %79 {offsets = [0, 128], sizes = [8, 128], strides = [1, 1]} : vector<8x512xf32> to vector<8x128xf32>
    %87 = arith.negf %86 : vector<8x128xf32>
    %88 = math.exp %87 : vector<8x128xf32>
    %cst_38 = arith.constant 1.000000e+00 : f32
    %89 = vector.broadcast %cst_38 : f32 to vector<8x128xf32>
    %90 = arith.addf %89, %88 : vector<8x128xf32>
    %91 = arith.divf %89, %90 : vector<8x128xf32>
    %92 = vector.extract_strided_slice %79 {offsets = [0, 256], sizes = [8, 128], strides = [1, 1]} : vector<8x512xf32> to vector<8x128xf32>
    %93 = math.tanh %92 : vector<8x128xf32>
    %94 = vector.extract_strided_slice %79 {offsets = [0, 384], sizes = [8, 128], strides = [1, 1]} : vector<8x512xf32> to vector<8x128xf32>
    %95 = arith.negf %94 : vector<8x128xf32>
    %96 = math.exp %95 : vector<8x128xf32>
    %cst_39 = arith.constant 1.000000e+00 : f32
    %97 = vector.broadcast %cst_39 : f32 to vector<8x128xf32>
    %98 = arith.addf %97, %96 : vector<8x128xf32>
    %99 = arith.divf %97, %98 : vector<8x128xf32>
    %100 = arith.mulf %91, %70 : vector<8x128xf32>
    %101 = arith.mulf %85, %93 : vector<8x128xf32>
    %102 = arith.addf %100, %101 : vector<8x128xf32>
    %103 = math.tanh %102 : vector<8x128xf32>
    %104 = arith.mulf %99, %103 : vector<8x128xf32>
    %c2_40 = arith.constant 2 : index
    %c0_41 = arith.constant 0 : index
    %c0_42 = arith.constant 0 : index
    %105 = vector.load %arg13[%c2_40, %c0_41, %c0_42] : memref<8x8x128xf32, #tpu.memory_space<vmem>>, vector<1x8x128xf32>
    %106 = vector.shape_cast %105 : vector<1x8x128xf32> to vector<8x128xf32>
    %107 = vector.shape_cast %104 : vector<8x128xf32> to vector<1x8x128xf32>
    tpu.vector_store %arg13[%c2_40, %c0_41, %c0_42], %107 {strides = array<i32>} : memref<8x8x128xf32, #tpu.memory_space<vmem>>, vector<1x8x128xf32>,
    %c3 = arith.constant 3 : index
    %c0_43 = arith.constant 0 : index
    %c0_44 = arith.constant 0 : index
    %108 = vector.load %arg12[%c3, %c0_43, %c0_44] : memref<8x8x512xf32, #tpu.memory_space<vmem>>, vector<1x8x512xf32>
    %109 = vector.shape_cast %108 : vector<1x8x512xf32> to vector<8x512xf32>
    %cst_45 = arith.constant dense<0.000000e+00> : vector<8x512xf32>
    %110 = tpu.matmul %104, %9, %cst_45 {dimension_numbers = #tpu.dot_dimension_numbers<[1], [0], [0], [1], [0, 0, 1, 1], [], []>} : vector<8x128xf32>, vector<128x512xf32>, vector<8x512xf32> -> vector<8x512xf32>
    %111 = arith.addf %109, %110 : vector<8x512xf32>
    %112 = vector.extract_strided_slice %111 {offsets = [0, 0], sizes = [8, 128], strides = [1, 1]} : vector<8x512xf32> to vector<8x128xf32>
    %113 = arith.negf %112 : vector<8x128xf32>
    %114 = math.exp %113 : vector<8x128xf32>
    %cst_46 = arith.constant 1.000000e+00 : f32
    %115 = vector.broadcast %cst_46 : f32 to vector<8x128xf32>
    %116 = arith.addf %115, %114 : vector<8x128xf32>
    %117 = arith.divf %115, %116 : vector<8x128xf32>
    %118 = vector.extract_strided_slice %111 {offsets = [0, 128], sizes = [8, 128], strides = [1, 1]} : vector<8x512xf32> to vector<8x128xf32>
    %119 = arith.negf %118 : vector<8x128xf32>
    %120 = math.exp %119 : vector<8x128xf32>
    %cst_47 = arith.constant 1.000000e+00 : f32
    %121 = vector.broadcast %cst_47 : f32 to vector<8x128xf32>
    %122 = arith.addf %121, %120 : vector<8x128xf32>
    %123 = arith.divf %121, %122 : vector<8x128xf32>
    %124 = vector.extract_strided_slice %111 {offsets = [0, 256], sizes = [8, 128], strides = [1, 1]} : vector<8x512xf32> to vector<8x128xf32>
    %125 = math.tanh %124 : vector<8x128xf32>
    %126 = vector.extract_strided_slice %111 {offsets = [0, 384], sizes = [8, 128], strides = [1, 1]} : vector<8x512xf32> to vector<8x128xf32>
    %127 = arith.negf %126 : vector<8x128xf32>
    %128 = math.exp %127 : vector<8x128xf32>
    %cst_48 = arith.constant 1.000000e+00 : f32
    %129 = vector.broadcast %cst_48 : f32 to vector<8x128xf32>
    %130 = arith.addf %129, %128 : vector<8x128xf32>
    %131 = arith.divf %129, %130 : vector<8x128xf32>
    %132 = arith.mulf %123, %102 : vector<8x128xf32>
    %133 = arith.mulf %117, %125 : vector<8x128xf32>
    %134 = arith.addf %132, %133 : vector<8x128xf32>
    %135 = math.tanh %134 : vector<8x128xf32>
    %136 = arith.mulf %131, %135 : vector<8x128xf32>
    %c3_49 = arith.constant 3 : index
    %c0_50 = arith.constant 0 : index
    %c0_51 = arith.constant 0 : index
    %137 = vector.load %arg13[%c3_49, %c0_50, %c0_51] : memref<8x8x128xf32, #tpu.memory_space<vmem>>, vector<1x8x128xf32>
    %138 = vector.shape_cast %137 : vector<1x8x128xf32> to vector<8x128xf32>
    %139 = vector.shape_cast %136 : vector<8x128xf32> to vector<1x8x128xf32>
    tpu.vector_store %arg13[%c3_49, %c0_50, %c0_51], %139 {strides = array<i32>} : memref<8x8x128xf32, #tpu.memory_space<vmem>>, vector<1x8x128xf32>,
    %c4 = arith.constant 4 : index
    %c0_52 = arith.constant 0 : index
    %c0_53 = arith.constant 0 : index
    %140 = vector.load %arg12[%c4, %c0_52, %c0_53] : memref<8x8x512xf32, #tpu.memory_space<vmem>>, vector<1x8x512xf32>
    %141 = vector.shape_cast %140 : vector<1x8x512xf32> to vector<8x512xf32>
    %cst_54 = arith.constant dense<0.000000e+00> : vector<8x512xf32>
    %142 = tpu.matmul %136, %9, %cst_54 {dimension_numbers = #tpu.dot_dimension_numbers<[1], [0], [0], [1], [0, 0, 1, 1], [], []>} : vector<8x128xf32>, vector<128x512xf32>, vector<8x512xf32> -> vector<8x512xf32>
    %143 = arith.addf %141, %142 : vector<8x512xf32>
    %144 = vector.extract_strided_slice %143 {offsets = [0, 0], sizes = [8, 128], strides = [1, 1]} : vector<8x512xf32> to vector<8x128xf32>
    %145 = arith.negf %144 : vector<8x128xf32>
    %146 = math.exp %145 : vector<8x128xf32>
    %cst_55 = arith.constant 1.000000e+00 : f32
    %147 = vector.broadcast %cst_55 : f32 to vector<8x128xf32>
    %148 = arith.addf %147, %146 : vector<8x128xf32>
    %149 = arith.divf %147, %148 : vector<8x128xf32>
    %150 = vector.extract_strided_slice %143 {offsets = [0, 128], sizes = [8, 128], strides = [1, 1]} : vector<8x512xf32> to vector<8x128xf32>
    %151 = arith.negf %150 : vector<8x128xf32>
    %152 = math.exp %151 : vector<8x128xf32>
    %cst_56 = arith.constant 1.000000e+00 : f32
    %153 = vector.broadcast %cst_56 : f32 to vector<8x128xf32>
    %154 = arith.addf %153, %152 : vector<8x128xf32>
    %155 = arith.divf %153, %154 : vector<8x128xf32>
    %156 = vector.extract_strided_slice %143 {offsets = [0, 256], sizes = [8, 128], strides = [1, 1]} : vector<8x512xf32> to vector<8x128xf32>
    %157 = math.tanh %156 : vector<8x128xf32>
    %158 = vector.extract_strided_slice %143 {offsets = [0, 384], sizes = [8, 128], strides = [1, 1]} : vector<8x512xf32> to vector<8x128xf32>
    %159 = arith.negf %158 : vector<8x128xf32>
    %160 = math.exp %159 : vector<8x128xf32>
    %cst_57 = arith.constant 1.000000e+00 : f32
    %161 = vector.broadcast %cst_57 : f32 to vector<8x128xf32>
    %162 = arith.addf %161, %160 : vector<8x128xf32>
    %163 = arith.divf %161, %162 : vector<8x128xf32>
    %164 = arith.mulf %155, %134 : vector<8x128xf32>
    %165 = arith.mulf %149, %157 : vector<8x128xf32>
    %166 = arith.addf %164, %165 : vector<8x128xf32>
    %167 = math.tanh %166 : vector<8x128xf32>
    %168 = arith.mulf %163, %167 : vector<8x128xf32>
    %c4_58 = arith.constant 4 : index
    %c0_59 = arith.constant 0 : index
    %c0_60 = arith.constant 0 : index
    %169 = vector.load %arg13[%c4_58, %c0_59, %c0_60] : memref<8x8x128xf32, #tpu.memory_space<vmem>>, vector<1x8x128xf32>
    %170 = vector.shape_cast %169 : vector<1x8x128xf32> to vector<8x128xf32>
    %171 = vector.shape_cast %168 : vector<8x128xf32> to vector<1x8x128xf32>
    tpu.vector_store %arg13[%c4_58, %c0_59, %c0_60], %171 {strides = array<i32>} : memref<8x8x128xf32, #tpu.memory_space<vmem>>, vector<1x8x128xf32>,
    %c5 = arith.constant 5 : index
    %c0_61 = arith.constant 0 : index
    %c0_62 = arith.constant 0 : index
    %172 = vector.load %arg12[%c5, %c0_61, %c0_62] : memref<8x8x512xf32, #tpu.memory_space<vmem>>, vector<1x8x512xf32>
    %173 = vector.shape_cast %172 : vector<1x8x512xf32> to vector<8x512xf32>
    %cst_63 = arith.constant dense<0.000000e+00> : vector<8x512xf32>
    %174 = tpu.matmul %168, %9, %cst_63 {dimension_numbers = #tpu.dot_dimension_numbers<[1], [0], [0], [1], [0, 0, 1, 1], [], []>} : vector<8x128xf32>, vector<128x512xf32>, vector<8x512xf32> -> vector<8x512xf32>
    %175 = arith.addf %173, %174 : vector<8x512xf32>
    %176 = vector.extract_strided_slice %175 {offsets = [0, 0], sizes = [8, 128], strides = [1, 1]} : vector<8x512xf32> to vector<8x128xf32>
    %177 = arith.negf %176 : vector<8x128xf32>
    %178 = math.exp %177 : vector<8x128xf32>
    %cst_64 = arith.constant 1.000000e+00 : f32
    %179 = vector.broadcast %cst_64 : f32 to vector<8x128xf32>
    %180 = arith.addf %179, %178 : vector<8x128xf32>
    %181 = arith.divf %179, %180 : vector<8x128xf32>
    %182 = vector.extract_strided_slice %175 {offsets = [0, 128], sizes = [8, 128], strides = [1, 1]} : vector<8x512xf32> to vector<8x128xf32>
    %183 = arith.negf %182 : vector<8x128xf32>
    %184 = math.exp %183 : vector<8x128xf32>
    %cst_65 = arith.constant 1.000000e+00 : f32
    %185 = vector.broadcast %cst_65 : f32 to vector<8x128xf32>
    %186 = arith.addf %185, %184 : vector<8x128xf32>
    %187 = arith.divf %185, %186 : vector<8x128xf32>
    %188 = vector.extract_strided_slice %175 {offsets = [0, 256], sizes = [8, 128], strides = [1, 1]} : vector<8x512xf32> to vector<8x128xf32>
    %189 = math.tanh %188 : vector<8x128xf32>
    %190 = vector.extract_strided_slice %175 {offsets = [0, 384], sizes = [8, 128], strides = [1, 1]} : vector<8x512xf32> to vector<8x128xf32>
    %191 = arith.negf %190 : vector<8x128xf32>
    %192 = math.exp %191 : vector<8x128xf32>
    %cst_66 = arith.constant 1.000000e+00 : f32
    %193 = vector.broadcast %cst_66 : f32 to vector<8x128xf32>
    %194 = arith.addf %193, %192 : vector<8x128xf32>
    %195 = arith.divf %193, %194 : vector<8x128xf32>
    %196 = arith.mulf %187, %166 : vector<8x128xf32>
    %197 = arith.mulf %181, %189 : vector<8x128xf32>
    %198 = arith.addf %196, %197 : vector<8x128xf32>
    %199 = math.tanh %198 : vector<8x128xf32>
    %200 = arith.mulf %195, %199 : vector<8x128xf32>
    %c5_67 = arith.constant 5 : index
    %c0_68 = arith.constant 0 : index
    %c0_69 = arith.constant 0 : index
    %201 = vector.load %arg13[%c5_67, %c0_68, %c0_69] : memref<8x8x128xf32, #tpu.memory_space<vmem>>, vector<1x8x128xf32>
    %202 = vector.shape_cast %201 : vector<1x8x128xf32> to vector<8x128xf32>
    %203 = vector.shape_cast %200 : vector<8x128xf32> to vector<1x8x128xf32>
    tpu.vector_store %arg13[%c5_67, %c0_68, %c0_69], %203 {strides = array<i32>} : memref<8x8x128xf32, #tpu.memory_space<vmem>>, vector<1x8x128xf32>,
    %c6 = arith.constant 6 : index
    %c0_70 = arith.constant 0 : index
    %c0_71 = arith.constant 0 : index
    %204 = vector.load %arg12[%c6, %c0_70, %c0_71] : memref<8x8x512xf32, #tpu.memory_space<vmem>>, vector<1x8x512xf32>
    %205 = vector.shape_cast %204 : vector<1x8x512xf32> to vector<8x512xf32>
    %cst_72 = arith.constant dense<0.000000e+00> : vector<8x512xf32>
    %206 = tpu.matmul %200, %9, %cst_72 {dimension_numbers = #tpu.dot_dimension_numbers<[1], [0], [0], [1], [0, 0, 1, 1], [], []>} : vector<8x128xf32>, vector<128x512xf32>, vector<8x512xf32> -> vector<8x512xf32>
    %207 = arith.addf %205, %206 : vector<8x512xf32>
    %208 = vector.extract_strided_slice %207 {offsets = [0, 0], sizes = [8, 128], strides = [1, 1]} : vector<8x512xf32> to vector<8x128xf32>
    %209 = arith.negf %208 : vector<8x128xf32>
    %210 = math.exp %209 : vector<8x128xf32>
    %cst_73 = arith.constant 1.000000e+00 : f32
    %211 = vector.broadcast %cst_73 : f32 to vector<8x128xf32>
    %212 = arith.addf %211, %210 : vector<8x128xf32>
    %213 = arith.divf %211, %212 : vector<8x128xf32>
    %214 = vector.extract_strided_slice %207 {offsets = [0, 128], sizes = [8, 128], strides = [1, 1]} : vector<8x512xf32> to vector<8x128xf32>
    %215 = arith.negf %214 : vector<8x128xf32>
    %216 = math.exp %215 : vector<8x128xf32>
    %cst_74 = arith.constant 1.000000e+00 : f32
    %217 = vector.broadcast %cst_74 : f32 to vector<8x128xf32>
    %218 = arith.addf %217, %216 : vector<8x128xf32>
    %219 = arith.divf %217, %218 : vector<8x128xf32>
    %220 = vector.extract_strided_slice %207 {offsets = [0, 256], sizes = [8, 128], strides = [1, 1]} : vector<8x512xf32> to vector<8x128xf32>
    %221 = math.tanh %220 : vector<8x128xf32>
    %222 = vector.extract_strided_slice %207 {offsets = [0, 384], sizes = [8, 128], strides = [1, 1]} : vector<8x512xf32> to vector<8x128xf32>
    %223 = arith.negf %222 : vector<8x128xf32>
    %224 = math.exp %223 : vector<8x128xf32>
    %cst_75 = arith.constant 1.000000e+00 : f32
    %225 = vector.broadcast %cst_75 : f32 to vector<8x128xf32>
    %226 = arith.addf %225, %224 : vector<8x128xf32>
    %227 = arith.divf %225, %226 : vector<8x128xf32>
    %228 = arith.mulf %219, %198 : vector<8x128xf32>
    %229 = arith.mulf %213, %221 : vector<8x128xf32>
    %230 = arith.addf %228, %229 : vector<8x128xf32>
    %231 = math.tanh %230 : vector<8x128xf32>
    %232 = arith.mulf %227, %231 : vector<8x128xf32>
    %c6_76 = arith.constant 6 : index
    %c0_77 = arith.constant 0 : index
    %c0_78 = arith.constant 0 : index
    %233 = vector.load %arg13[%c6_76, %c0_77, %c0_78] : memref<8x8x128xf32, #tpu.memory_space<vmem>>, vector<1x8x128xf32>
    %234 = vector.shape_cast %233 : vector<1x8x128xf32> to vector<8x128xf32>
    %235 = vector.shape_cast %232 : vector<8x128xf32> to vector<1x8x128xf32>
    tpu.vector_store %arg13[%c6_76, %c0_77, %c0_78], %235 {strides = array<i32>} : memref<8x8x128xf32, #tpu.memory_space<vmem>>, vector<1x8x128xf32>,
    %c7 = arith.constant 7 : index
    %c0_79 = arith.constant 0 : index
    %c0_80 = arith.constant 0 : index
    %236 = vector.load %arg12[%c7, %c0_79, %c0_80] : memref<8x8x512xf32, #tpu.memory_space<vmem>>, vector<1x8x512xf32>
    %237 = vector.shape_cast %236 : vector<1x8x512xf32> to vector<8x512xf32>
    %cst_81 = arith.constant dense<0.000000e+00> : vector<8x512xf32>
    %238 = tpu.matmul %232, %9, %cst_81 {dimension_numbers = #tpu.dot_dimension_numbers<[1], [0], [0], [1], [0, 0, 1, 1], [], []>} : vector<8x128xf32>, vector<128x512xf32>, vector<8x512xf32> -> vector<8x512xf32>
    %239 = arith.addf %237, %238 : vector<8x512xf32>
    %240 = vector.extract_strided_slice %239 {offsets = [0, 0], sizes = [8, 128], strides = [1, 1]} : vector<8x512xf32> to vector<8x128xf32>
    %241 = arith.negf %240 : vector<8x128xf32>
    %242 = math.exp %241 : vector<8x128xf32>
    %cst_82 = arith.constant 1.000000e+00 : f32
    %243 = vector.broadcast %cst_82 : f32 to vector<8x128xf32>
    %244 = arith.addf %243, %242 : vector<8x128xf32>
    %245 = arith.divf %243, %244 : vector<8x128xf32>
    %246 = vector.extract_strided_slice %239 {offsets = [0, 128], sizes = [8, 128], strides = [1, 1]} : vector<8x512xf32> to vector<8x128xf32>
    %247 = arith.negf %246 : vector<8x128xf32>
    %248 = math.exp %247 : vector<8x128xf32>
    %cst_83 = arith.constant 1.000000e+00 : f32
    %249 = vector.broadcast %cst_83 : f32 to vector<8x128xf32>
    %250 = arith.addf %249, %248 : vector<8x128xf32>
    %251 = arith.divf %249, %250 : vector<8x128xf32>
    %252 = vector.extract_strided_slice %239 {offsets = [0, 256], sizes = [8, 128], strides = [1, 1]} : vector<8x512xf32> to vector<8x128xf32>
    %253 = math.tanh %252 : vector<8x128xf32>
    %254 = vector.extract_strided_slice %239 {offsets = [0, 384], sizes = [8, 128], strides = [1, 1]} : vector<8x512xf32> to vector<8x128xf32>
    %255 = arith.negf %254 : vector<8x128xf32>
    %256 = math.exp %255 : vector<8x128xf32>
    %cst_84 = arith.constant 1.000000e+00 : f32
    %257 = vector.broadcast %cst_84 : f32 to vector<8x128xf32>
    %258 = arith.addf %257, %256 : vector<8x128xf32>
    %259 = arith.divf %257, %258 : vector<8x128xf32>
    %260 = arith.mulf %251, %230 : vector<8x128xf32>
    %261 = arith.mulf %245, %253 : vector<8x128xf32>
    %262 = arith.addf %260, %261 : vector<8x128xf32>
    %263 = math.tanh %262 : vector<8x128xf32>
    %264 = arith.mulf %259, %263 : vector<8x128xf32>
    %c7_85 = arith.constant 7 : index
    %c0_86 = arith.constant 0 : index
    %c0_87 = arith.constant 0 : index
    %265 = vector.load %arg13[%c7_85, %c0_86, %c0_87] : memref<8x8x128xf32, #tpu.memory_space<vmem>>, vector<1x8x128xf32>
    %266 = vector.shape_cast %265 : vector<1x8x128xf32> to vector<8x128xf32>
    %267 = vector.shape_cast %264 : vector<8x128xf32> to vector<1x8x128xf32>
    tpu.vector_store %arg13[%c7_85, %c0_86, %c0_87], %267 {strides = array<i32>} : memref<8x8x128xf32, #tpu.memory_space<vmem>>, vector<1x8x128xf32>,
    %c0_88 = arith.constant 0 : index
    %c0_89 = arith.constant 0 : index
    %268 = vector.load %arg10[%c0_88, %c0_89] : memref<8x128xf32, #tpu.memory_space<vmem>>, vector<8x128xf32>
    tpu.vector_store %arg10[%c0_88, %c0_89], %264 {strides = array<i32>} : memref<8x128xf32, #tpu.memory_space<vmem>>, vector<8x128xf32>,
    %c0_90 = arith.constant 0 : index
    %c0_91 = arith.constant 0 : index
    %269 = vector.load %arg11[%c0_90, %c0_91] : memref<8x128xf32, #tpu.memory_space<vmem>>, vector<8x128xf32>
    tpu.vector_store %arg11[%c0_90, %c0_91], %262 {strides = array<i32>} : memref<8x128xf32, #tpu.memory_space<vmem>>, vector<8x128xf32>,
    %c0_92 = arith.constant 0 : index
    %c0_93 = arith.constant 0 : index
    %c0_94 = arith.constant 0 : index
    %270 = vector.load %arg13[%c0_92, %c0_93, %c0_94] : memref<8x8x128xf32, #tpu.memory_space<vmem>>, vector<8x8x128xf32>
    %271 = vector.shape_cast %270 : vector<8x8x128xf32> to vector<64x128xf32>
    %c0_95 = arith.constant 0 : index
    %c0_96 = arith.constant 0 : index
    %272 = vector.load %arg7[%c0_95, %c0_96] : memref<128x128xf32, #tpu.memory_space<vmem>>, vector<128x128xf32>
    %cst_97 = arith.constant dense<0.000000e+00> : vector<64x128xf32>
    %273 = tpu.matmul %271, %272, %cst_97 {dimension_numbers = #tpu.dot_dimension_numbers<[1], [0], [0], [1], [0, 0, 1, 1], [], []>} : vector<64x128xf32>, vector<128x128xf32>, vector<64x128xf32> -> vector<64x128xf32>
    %c0_98 = arith.constant 0 : index
    %c0_99 = arith.constant 0 : index
    %274 = vector.load %arg8[%c0_98, %c0_99] : memref<1x128xf32, #tpu.memory_space<vmem>>, vector<1x128xf32>
    %275 = vector.broadcast %274 : vector<1x128xf32> to vector<64x128xf32>
    %276 = arith.addf %273, %275 : vector<64x128xf32>
    %277 = vector.shape_cast %276 : vector<64x128xf32> to vector<8x8x128xf32>
    %c0_100 = arith.constant 0 : index
    %c0_101 = arith.constant 0 : index
    %c0_102 = arith.constant 0 : index
    %278 = vector.load %arg9[%c0_100, %c0_101, %c0_102] : memref<8x8x128xf32, #tpu.memory_space<vmem>>, vector<8x8x128xf32>
    tpu.vector_store %arg9[%c0_100, %c0_101, %c0_102], %277 {strides = array<i32>} : memref<8x8x128xf32, #tpu.memory_space<vmem>>, vector<8x8x128xf32>,
    return
  }
  func.func @transform_0(%arg0: i32) -> (i32, i32, i32) {
    %c0_i32 = arith.constant 0 : i32
    %c0_i32_0 = arith.constant 0 : i32
    %c0_i32_1 = arith.constant 0 : i32
    %c0_i32_2 = arith.constant 0 : i32
    return %c0_i32, %c0_i32_0, %c0_i32_1 : i32, i32, i32
  }
  func.func @transform_1(%arg0: i32) -> (i32, i32) {
    %c0_i32 = arith.constant 0 : i32
    %c0_i32_0 = arith.constant 0 : i32
    %c0_i32_1 = arith.constant 0 : i32
    return %c0_i32, %c0_i32_0 : i32, i32
  }
  func.func @transform_2(%arg0: i32) -> (i32, i32) {
    %c0_i32 = arith.constant 0 : i32
    %c0_i32_0 = arith.constant 0 : i32
    %c0_i32_1 = arith.constant 0 : i32
    return %c0_i32, %c0_i32_0 : i32, i32
  }
  func.func @transform_3(%arg0: i32) -> (i32, i32) {
    %c0_i32 = arith.constant 0 : i32
    %c0_i32_0 = arith.constant 0 : i32
    %c0_i32_1 = arith.constant 0 : i32
    return %c0_i32, %c0_i32_0 : i32, i32
  }
  func.func @transform_4(%arg0: i32) -> (i32, i32) {
    %c0_i32 = arith.constant 0 : i32
    %c0_i32_0 = arith.constant 0 : i32
    %c0_i32_1 = arith.constant 0 : i32
    return %c0_i32, %c0_i32_0 : i32, i32
  }
  func.func @transform_5(%arg0: i32) -> (i32, i32) {
    %c0_i32 = arith.constant 0 : i32
    %c0_i32_0 = arith.constant 0 : i32
    %c0_i32_1 = arith.constant 0 : i32
    return %c0_i32, %c0_i32_0 : i32, i32
  }
  func.func @transform_6(%arg0: i32) -> (i32, i32) {
    %c0_i32 = arith.constant 0 : i32
    %c0_i32_0 = arith.constant 0 : i32
    %c0_i32_1 = arith.constant 0 : i32
    return %c0_i32, %c0_i32_0 : i32, i32
  }
  func.func @transform_7(%arg0: i32) -> (i32, i32) {
    %c0_i32 = arith.constant 0 : i32
    %c0_i32_0 = arith.constant 0 : i32
    %c0_i32_1 = arith.constant 0 : i32
    return %c0_i32, %c0_i32_0 : i32, i32
  }
  func.func @transform_8(%arg0: i32) -> (i32, i32, i32) {
    %c0_i32 = arith.constant 0 : i32
    %c0_i32_0 = arith.constant 0 : i32
    %c0_i32_1 = arith.constant 0 : i32
    %c0_i32_2 = arith.constant 0 : i32
    return %c0_i32, %c0_i32_0, %c0_i32_1 : i32, i32, i32
  }
  func.func @transform_9(%arg0: i32) -> (i32, i32) {
    %c0_i32 = arith.constant 0 : i32
    %c0_i32_0 = arith.constant 0 : i32
    %c0_i32_1 = arith.constant 0 : i32
    return %c0_i32, %c0_i32_0 : i32, i32
  }
  func.func @transform_10(%arg0: i32) -> (i32, i32) {
    %c0_i32 = arith.constant 0 : i32
    %c0_i32_0 = arith.constant 0 : i32
    %c0_i32_1 = arith.constant 0 : i32
    return %c0_i32, %c0_i32_0 : i32, i32
  }
}

</mosaic_0001>

<llo_original>
// kernel: _char_decoder_forward_impl.1
$region0: #{_char_decoder_forward_impl.1}
  #allocation0 [shape = 'u32[]', space=smem, size = 0x4, offset = 0x4, fixed_abs, tag = 'smem constant byte address 0x4 - core index']
  #allocation1 [shape = 'u32[144,128]{1,0:T(1,128)}', space=vmem, size = 0x12000, scoped, tag = 'internal scratch']
  #allocation2 [shape = 'f32[8,8,512]{2,1,0:T(8,128)}', space=vmem, size = 0x20000, scoped, tag = 'scratch operand']
  #allocation3 [shape = 'f32[8,8,128]{2,1,0:T(8,128)}', space=vmem, size = 0x8000, scoped, tag = 'scratch operand']
  %s0 = inlined_call_operand.vmem [shape: f32[8,8,128], index: 0, kind: input, shape index: {}]
  %s1 = inlined_call_operand.vmem [shape: f32[8,128], index: 1, kind: input, shape index: {}]
  %s2 = inlined_call_operand.vmem [shape: f32[8,128], index: 2, kind: input, shape index: {}]
  %s3 = inlined_call_operand.vmem [shape: f32[128,512], index: 3, kind: input, shape index: {}]
  %s4 = inlined_call_operand.vmem [shape: f32[1,512], index: 4, kind: input, shape index: {}]
  %s5 = inlined_call_operand.hbm [shape: f32[128,512], index: 5, kind: input, shape index: {}]
  %s6 = inlined_call_operand.vmem [shape: f32[128,128], index: 6, kind: input, shape index: {}]
  %s7 = inlined_call_operand.vmem [shape: f32[1,128], index: 7, kind: input, shape index: {}]
  %s8 = inlined_call_operand.vmem [shape: f32[8,8,128], index: 8, kind: output, shape index: {0}]
  %s9 = inlined_call_operand.vmem [shape: f32[8,128], index: 9, kind: output, shape index: {1}]
  %s10 = inlined_call_operand.vmem [shape: f32[8,128], index: 10, kind: output, shape index: {2}]
  %11 = xla_tuple %s8, %s9, %s10
  %s12 = sld [smem:[#allocation0]]
  $region62: #{_char_decoder_forward_impl.1} parent=0
    _
  %s14 = ssub.s32 1, %s12
  %s15 = scalar_select 0, %s14, %s12
  $region1: #{_char_decoder_forward_impl.1} parent=0
    #allocation4 [shape = 'u8[262144]{0}', space=vmem, size = 0x40000, scoped, tag = 'input window, operand 5, single buffered']
    #allocation5 [shape = 's32[1]{0}', space=sflag, size = 0x4, scoped, tag = 'scoped memory for _char_decoder_forward_impl.1']
    %16 = vsyncpa [#allocation5], 0
    // Predicated region
    $region2: #{_char_decoder_forward_impl.1} parent=1 // pred_check
      _
    $region3: #{_char_decoder_forward_impl.1} parent=1 // pred_check_branch
      %18 = sbr.rel (0) target = $region5
    $region4: #{_char_decoder_forward_impl.1} parent=1 // pred_region
      _
    $region5: #{_char_decoder_forward_impl.1} parent=1 // pred_fallthru
      _
    // Predicated region
    $region6: #{_char_decoder_forward_impl.1} parent=1 // pred_check
      _
    $region7: #{_char_decoder_forward_impl.1} parent=1 // pred_check_branch
      %20 = sbr.rel (0) target = $region9
    $region8: #{_char_decoder_forward_impl.1} parent=1 // pred_region
      _
    $region9: #{_char_decoder_forward_impl.1} parent=1 // pred_fallthru
      _
    // Predicated region
    $region10: #{_char_decoder_forward_impl.1} parent=1 // pred_check
      _
    $region11: #{_char_decoder_forward_impl.1} parent=1 // pred_check_branch
      %22 = sbr.rel (0) target = $region13
    $region12: #{_char_decoder_forward_impl.1} parent=1 // pred_region
      _
    $region13: #{_char_decoder_forward_impl.1} parent=1 // pred_fallthru
      _
    // Predicated region
    $region14: #{_char_decoder_forward_impl.1} parent=1 // pred_check
      _
    $region15: #{_char_decoder_forward_impl.1} parent=1 // pred_check_branch
      %24 = sbr.rel (0) target = $region17
    $region16: #{_char_decoder_forward_impl.1} parent=1 // pred_region
      _
    $region17: #{_char_decoder_forward_impl.1} parent=1 // pred_fallthru
      _
    // Predicated region
    $region18: #{_char_decoder_forward_impl.1} parent=1 // pred_check
      _
    $region19: #{_char_decoder_forward_impl.1} parent=1 // pred_check_branch
      %26 = sbr.rel (0) target = $region21
    $region20: #{_char_decoder_forward_impl.1} parent=1 // pred_region
      _
    $region21: #{_char_decoder_forward_impl.1} parent=1 // pred_fallthru
      _
    // Predicated region
    $region22: #{_char_decoder_forward_impl.1} parent=1 // pred_check
      _
    $region23: #{_char_decoder_forward_impl.1} parent=1 // pred_check_branch
      %28 = sbr.rel (0) target = $region25
    $region24: #{_char_decoder_forward_impl.1} parent=1 // pred_region
      %s30 = ssub.s32 8192, 8192
      %31 = vsyncadd [#allocation5], %s30
      %s32 = sshll.u32 [#allocation4], 4
      %s33 = int_to_ptr.vmem [resolvable:$true] %s32
      %38 = dma.hbm_to_vmem [thread:$0]  %s5, 8192, %s33, [#allocation5], 512, 512, 32
    $region25: #{_char_decoder_forward_impl.1} parent=1 // pred_fallthru
      _
    // Predicated region
    $region26: #{_char_decoder_forward_impl.1} parent=1 // pred_check
      _
    $region27: #{_char_decoder_forward_impl.1} parent=1 // pred_check_branch
      %40 = sbr.rel (0) target = $region29
    $region28: #{_char_decoder_forward_impl.1} parent=1 // pred_region
      _
    $region29: #{_char_decoder_forward_impl.1} parent=1 // pred_fallthru
      _
    // Predicated region
    $region30: #{_char_decoder_forward_impl.1} parent=1 // pred_check
      _
    $region31: #{_char_decoder_forward_impl.1} parent=1 // pred_check_branch
      %42 = sbr.rel (0) target = $region33
    $region32: #{_char_decoder_forward_impl.1} parent=1 // pred_region
      _
    $region33: #{_char_decoder_forward_impl.1} parent=1 // pred_fallthru
      _
    // Predicated region
    $region34: #{_char_decoder_forward_impl.1} parent=1 // pred_check
      _
    $region35: #{_char_decoder_forward_impl.1} parent=1 // pred_check_branch
      %44 = sbr.rel (0) target = $region37
    $region36: #{_char_decoder_forward_impl.1} parent=1 // pred_region
      %45 = dma.done [#allocation5], 8192
    $region37: #{_char_decoder_forward_impl.1} parent=1 // pred_fallthru
      _
    %v46 = vld [vmem:[%s0] sm:$0xff]
    %v47 = vld [vmem:[%s0 + $0x8] sm:$0xff]
    %v48 = vld [vmem:[%s0 + $0x10] sm:$0xff]
    %v49 = vld [vmem:[%s0 + $0x18] sm:$0xff]
    %v50 = vld [vmem:[%s0 + $0x20] sm:$0xff]
    %v51 = vld [vmem:[%s0 + $0x28] sm:$0xff]
    %v52 = vld [vmem:[%s0 + $0x30] sm:$0xff]
    %v53 = vld [vmem:[%s0 + $0x38] sm:$0xff]
    %v54 = vld [vmem:[%s3] sm:$0xff]
    %v55 = vld [vmem:[%s3 + $0x8] sm:$0xff]
    %v56 = vld [vmem:[%s3 + $0x10] sm:$0xff]
    %v57 = vld [vmem:[%s3 + $0x18] sm:$0xff]
    %v58 = vld [vmem:[%s3 + $0x20] sm:$0xff]
    %v59 = vld [vmem:[%s3 + $0x28] sm:$0xff]
    %v60 = vld [vmem:[%s3 + $0x30] sm:$0xff]
    %v61 = vld [vmem:[%s3 + $0x38] sm:$0xff]
    %v62 = vld [vmem:[%s3 + $0x40] sm:$0xff]
    %v63 = vld [vmem:[%s3 + $0x48] sm:$0xff]
    %v64 = vld [vmem:[%s3 + $0x50] sm:$0xff]
    %v65 = vld [vmem:[%s3 + $0x58] sm:$0xff]
    %v66 = vld [vmem:[%s3 + $0x60] sm:$0xff]
    %v67 = vld [vmem:[%s3 + $0x68] sm:$0xff]
    %v68 = vld [vmem:[%s3 + $0x70] sm:$0xff]
    %v69 = vld [vmem:[%s3 + $0x78] sm:$0xff]
    %v70 = vld [vmem:[%s3 + $0x80] sm:$0xff]
    %v71 = vld [vmem:[%s3 + $0x88] sm:$0xff]
    %v72 = vld [vmem:[%s3 + $0x90] sm:$0xff]
    %v73 = vld [vmem:[%s3 + $0x98] sm:$0xff]
    %v74 = vld [vmem:[%s3 + $0xa0] sm:$0xff]
    %v75 = vld [vmem:[%s3 + $0xa8] sm:$0xff]
    %v76 = vld [vmem:[%s3 + $0xb0] sm:$0xff]
    %v77 = vld [vmem:[%s3 + $0xb8] sm:$0xff]
    %v78 = vld [vmem:[%s3 + $0xc0] sm:$0xff]
    %v79 = vld [vmem:[%s3 + $0xc8] sm:$0xff]
    %v80 = vld [vmem:[%s3 + $0xd0] sm:$0xff]
    %v81 = vld [vmem:[%s3 + $0xd8] sm:$0xff]
    %v82 = vld [vmem:[%s3 + $0xe0] sm:$0xff]
    %v83 = vld [vmem:[%s3 + $0xe8] sm:$0xff]
    %v84 = vld [vmem:[%s3 + $0xf0] sm:$0xff]
    %v85 = vld [vmem:[%s3 + $0xf8] sm:$0xff]
    %v86 = vld [vmem:[%s3 + $0x100] sm:$0xff]
    %v87 = vld [vmem:[%s3 + $0x108] sm:$0xff]
    %v88 = vld [vmem:[%s3 + $0x110] sm:$0xff]
    %v89 = vld [vmem:[%s3 + $0x118] sm:$0xff]
    %v90 = vld [vmem:[%s3 + $0x120] sm:$0xff]
    %v91 = vld [vmem:[%s3 + $0x128] sm:$0xff]
    %v92 = vld [vmem:[%s3 + $0x130] sm:$0xff]
    %v93 = vld [vmem:[%s3 + $0x138] sm:$0xff]
    %v94 = vld [vmem:[%s3 + $0x140] sm:$0xff]
    %v95 = vld [vmem:[%s3 + $0x148] sm:$0xff]
    %v96 = vld [vmem:[%s3 + $0x150] sm:$0xff]
    %v97 = vld [vmem:[%s3 + $0x158] sm:$0xff]
    %v98 = vld [vmem:[%s3 + $0x160] sm:$0xff]
    %v99 = vld [vmem:[%s3 + $0x168] sm:$0xff]
    %v100 = vld [vmem:[%s3 + $0x170] sm:$0xff]
    %v101 = vld [vmem:[%s3 + $0x178] sm:$0xff]
    %v102 = vld [vmem:[%s3 + $0x180] sm:$0xff]
    %v103 = vld [vmem:[%s3 + $0x188] sm:$0xff]
    %v104 = vld [vmem:[%s3 + $0x190] sm:$0xff]
    %v105 = vld [vmem:[%s3 + $0x198] sm:$0xff]
    %v106 = vld [vmem:[%s3 + $0x1a0] sm:$0xff]
    %v107 = vld [vmem:[%s3 + $0x1a8] sm:$0xff]
    %v108 = vld [vmem:[%s3 + $0x1b0] sm:$0xff]
    %v109 = vld [vmem:[%s3 + $0x1b8] sm:$0xff]
    %v110 = vld [vmem:[%s3 + $0x1c0] sm:$0xff]
    %v111 = vld [vmem:[%s3 + $0x1c8] sm:$0xff]
    %v112 = vld [vmem:[%s3 + $0x1d0] sm:$0xff]
    %v113 = vld [vmem:[%s3 + $0x1d8] sm:$0xff]
    %v114 = vld [vmem:[%s3 + $0x1e0] sm:$0xff]
    %v115 = vld [vmem:[%s3 + $0x1e8] sm:$0xff]
    %v116 = vld [vmem:[%s3 + $0x1f0] sm:$0xff]
    %v117 = vld [vmem:[%s3 + $0x1f8] sm:$0xff]
    %v118 = vld [vmem:[%s4] sm:$0xf]
    %v120 = vlaneseq
    %v121 = vshrl.u32 %v120, 7
    %v122 = vsub.s32 0, %v121
    %v123 = vrot.slane %v118, %v122
    %v124 = vlaneseq
    %v125 = vshrl.u32 %v124, 7
    %v126 = vsub.s32 1, %v125
    %v127 = vrot.slane %v118, %v126
    %v128 = vlaneseq
    %v129 = vshrl.u32 %v128, 7
    %v130 = vsub.s32 2, %v129
    %v131 = vrot.slane %v118, %v130
    %v132 = vlaneseq
    %v133 = vshrl.u32 %v132, 7
    %v134 = vsub.s32 3, %v133
    %v135 = vrot.slane %v118, %v134
    %140 = vmatprep.subr.mxu0 %v115
    %141 = vmatpush1.msra.mxu0 %v114
    %142 = vmatprep.subr.mxu0 %v111
    %143 = vmatpush1.msra.mxu0 %v110
    %144 = vmatprep.subr.mxu0 %v107
    %145 = vmatpush1.msra.mxu0 %v106
    %146 = vmatprep.subr.mxu0 %v103
    %147 = vmatpush1.msra.mxu0 %v102
    %148 = vmatprep.subr.mxu0 %v99
    %149 = vmatpush1.msra.mxu0 %v98
    %150 = vmatprep.subr.mxu0 %v95
    %151 = vmatpush1.msra.mxu0 %v94
    %152 = vmatprep.subr.mxu0 %v91
    %153 = vmatpush1.msra.mxu0 %v90
    %154 = vmatprep.subr.mxu0 %v87
    %155 = vmatpush1.msra.mxu0 %v86
    %156 = vmatprep.subr.mxu0 %v83
    %157 = vmatpush1.msra.mxu0 %v82
    %158 = vmatprep.subr.mxu0 %v79
    %159 = vmatpush1.msra.mxu0 %v78
    %160 = vmatprep.subr.mxu0 %v75
    %161 = vmatpush1.msra.mxu0 %v74
    %162 = vmatprep.subr.mxu0 %v71
    %163 = vmatpush1.msra.mxu0 %v70
    %164 = vmatprep.subr.mxu0 %v67
    %165 = vmatpush1.msra.mxu0 %v66
    %166 = vmatprep.subr.mxu0 %v63
    %167 = vmatpush1.msra.mxu0 %v62
    %168 = vmatprep.subr.mxu0 %v59
    %169 = vmatpush1.msra.mxu0 %v58
    %170 = vmatprep.subr.mxu0 %v55
    %171 = vmatpush1.msra.mxu0 %v54
    %172 = vmatprep.subr.mxu0 0.0
    %173 = vmatpush2.msra.mxu0 0.0
    %174 = vmatprep.subr.mxu0 0.0
    %175 = vmatpush2.msra.mxu0 0.0
    %176 = vmatprep.subr.mxu0 0.0
    %177 = vmatpush2.msra.mxu0 0.0
    %178 = vmatprep.subr.mxu0 0.0
    %179 = vmatpush2.msra.mxu0 0.0
    %180 = vmatprep.subr.mxu0 0.0
    %181 = vmatpush2.msra.mxu0 0.0
    %182 = vmatprep.subr.mxu0 0.0
    %183 = vmatpush2.msra.mxu0 0.0
    %184 = vmatprep.subr.mxu0 0.0
    %185 = vmatpush2.msra.mxu0 0.0
    %186 = vmatprep.subr.mxu0 0.0
    %187 = vmatpush2.msra.mxu0 0.0
    %188 = vmatprep.subr.mxu0 0.0
    %189 = vmatpush2.msra.mxu0 0.0
    %190 = vmatprep.subr.mxu0 0.0
    %191 = vmatpush2.msra.mxu0 0.0
    %192 = vmatprep.subr.mxu0 0.0
    %193 = vmatpush2.msra.mxu0 0.0
    %194 = vmatprep.subr.mxu0 0.0
    %195 = vmatpush2.msra.mxu0 0.0
    %196 = vmatprep.subr.mxu0 0.0
    %197 = vmatpush2.msra.mxu0 0.0
    %198 = vmatprep.subr.mxu0 0.0
    %199 = vmatpush2.msra.mxu0 0.0
    %200 = vmatprep.subr.mxu0 0.0
    %201 = vmatpush2.msra.mxu0 0.0
    %202 = vmatprep.subr.mxu0 0.0
    %203 = vmatpush2.msra.mxu0 0.0
    %204 = vmatprep.mubr.f32.mxu0 0.0
    %205 = vmatmul.mubr.f32.gmra.mxu0 %v46
    %v206 = vpop.f32.mrf.mxu0
    %v207 = vadd.f32 %v123, %v206
    %v208 = vpop.f32.mrf.mxu0
    %v209 = vadd.f32 %v127, %v208
    %210 = vmatprep.mubr.f32.mxu0 0.0
    %211 = vmatmul.mubr.f32.gmra.mxu0 %v47
    %v212 = vpop.f32.mrf.mxu0
    %v213 = vadd.f32 %v123, %v212
    %v214 = vpop.f32.mrf.mxu0
    %v215 = vadd.f32 %v127, %v214
    %216 = vmatprep.mubr.f32.mxu0 0.0
    %217 = vmatmul.mubr.f32.gmra.mxu0 %v48
    %v218 = vpop.f32.mrf.mxu0
    %v219 = vadd.f32 %v123, %v218
    %v220 = vpop.f32.mrf.mxu0
    %v221 = vadd.f32 %v127, %v220
    %222 = vmatprep.mubr.f32.mxu0 0.0
    %223 = vmatmul.mubr.f32.gmra.mxu0 %v49
    %v224 = vpop.f32.mrf.mxu0
    %v225 = vadd.f32 %v123, %v224
    %v226 = vpop.f32.mrf.mxu0
    %v227 = vadd.f32 %v127, %v226
    %228 = vmatprep.mubr.f32.mxu0 0.0
    %229 = vmatmul.mubr.f32.gmra.mxu0 %v50
    %v230 = vpop.f32.mrf.mxu0
    %v231 = vadd.f32 %v123, %v230
    %v232 = vpop.f32.mrf.mxu0
    %v233 = vadd.f32 %v127, %v232
    %234 = vmatprep.mubr.f32.mxu0 0.0
    %235 = vmatmul.mubr.f32.gmra.mxu0 %v51
    %v236 = vpop.f32.mrf.mxu0
    %v237 = vadd.f32 %v123, %v236
    %v238 = vpop.f32.mrf.mxu0
    %v239 = vadd.f32 %v127, %v238
    %240 = vmatprep.mubr.f32.mxu0 0.0
    %241 = vmatmul.mubr.f32.gmra.mxu0 %v52
    %v242 = vpop.f32.mrf.mxu0
    %v243 = vadd.f32 %v123, %v242
    %v244 = vpop.f32.mrf.mxu0
    %v245 = vadd.f32 %v127, %v244
    %246 = vmatprep.mubr.f32.mxu0 0.0
    %247 = vmatmul.mubr.f32.gmra.mxu0 %v53
    %v248 = vpop.f32.mrf.mxu0
    %v249 = vadd.f32 %v123, %v248
    %v250 = vpop.f32.mrf.mxu0
    %v251 = vadd.f32 %v127, %v250
    %252 = vdwg.mxu0
    %253 = vmatprep.subr.mxu0 %v117
    %254 = vmatpush1.msra.mxu0 %v116
    %255 = vmatprep.subr.mxu0 %v113
    %256 = vmatpush1.msra.mxu0 %v112
    %257 = vmatprep.subr.mxu0 %v109
    %258 = vmatpush1.msra.mxu0 %v108
    %259 = vmatprep.subr.mxu0 %v105
    %260 = vmatpush1.msra.mxu0 %v104
    %261 = vmatprep.subr.mxu0 %v101
    %262 = vmatpush1.msra.mxu0 %v100
    %263 = vmatprep.subr.mxu0 %v97
    %264 = vmatpush1.msra.mxu0 %v96
    %265 = vmatprep.subr.mxu0 %v93
    %266 = vmatpush1.msra.mxu0 %v92
    %267 = vmatprep.subr.mxu0 %v89
    %268 = vmatpush1.msra.mxu0 %v88
    %269 = vmatprep.subr.mxu0 %v85
    %270 = vmatpush1.msra.mxu0 %v84
    %271 = vmatprep.subr.mxu0 %v81
    %272 = vmatpush1.msra.mxu0 %v80
    %273 = vmatprep.subr.mxu0 %v77
    %274 = vmatpush1.msra.mxu0 %v76
    %275 = vmatprep.subr.mxu0 %v73
    %276 = vmatpush1.msra.mxu0 %v72
    %277 = vmatprep.subr.mxu0 %v69
    %278 = vmatpush1.msra.mxu0 %v68
    %279 = vmatprep.subr.mxu0 %v65
    %280 = vmatpush1.msra.mxu0 %v64
    %281 = vmatprep.subr.mxu0 %v61
    %282 = vmatpush1.msra.mxu0 %v60
    %283 = vmatprep.subr.mxu0 %v57
    %284 = vmatpush1.msra.mxu0 %v56
    %285 = vmatprep.subr.mxu0 0.0
    %286 = vmatpush2.msra.mxu0 0.0
    %287 = vmatprep.subr.mxu0 0.0
    %288 = vmatpush2.msra.mxu0 0.0
    %289 = vmatprep.subr.mxu0 0.0
    %290 = vmatpush2.msra.mxu0 0.0
    %291 = vmatprep.subr.mxu0 0.0
    %292 = vmatpush2.msra.mxu0 0.0
    %293 = vmatprep.subr.mxu0 0.0
    %294 = vmatpush2.msra.mxu0 0.0
    %295 = vmatprep.subr.mxu0 0.0
    %296 = vmatpush2.msra.mxu0 0.0
    %297 = vmatprep.subr.mxu0 0.0
    %298 = vmatpush2.msra.mxu0 0.0
    %299 = vmatprep.subr.mxu0 0.0
    %300 = vmatpush2.msra.mxu0 0.0
    %301 = vmatprep.subr.mxu0 0.0
    %302 = vmatpush2.msra.mxu0 0.0
    %303 = vmatprep.subr.mxu0 0.0
    %304 = vmatpush2.msra.mxu0 0.0
    %305 = vmatprep.subr.mxu0 0.0
    %306 = vmatpush2.msra.mxu0 0.0
    %307 = vmatprep.subr.mxu0 0.0
    %308 = vmatpush2.msra.mxu0 0.0
    %309 = vmatprep.subr.mxu0 0.0
    %310 = vmatpush2.msra.mxu0 0.0
    %311 = vmatprep.subr.mxu0 0.0
    %312 = vmatpush2.msra.mxu0 0.0
    %313 = vmatprep.subr.mxu0 0.0
    %314 = vmatpush2.msra.mxu0 0.0
    %315 = vmatprep.subr.mxu0 0.0
    %316 = vmatpush2.msra.mxu0 0.0
    %317 = vmatprep.mubr.f32.mxu0 0.0
    %318 = vmatmul.mubr.f32.gmra.mxu0 %v46
    %v319 = vpop.f32.mrf.mxu0
    %v320 = vadd.f32 %v131, %v319
    %v321 = vpop.f32.mrf.mxu0
    %v322 = vadd.f32 %v135, %v321
    %323 = vmatprep.mubr.f32.mxu0 0.0
    %324 = vmatmul.mubr.f32.gmra.mxu0 %v47
    %v325 = vpop.f32.mrf.mxu0
    %v326 = vadd.f32 %v131, %v325
    %v327 = vpop.f32.mrf.mxu0
    %v328 = vadd.f32 %v135, %v327
    %329 = vmatprep.mubr.f32.mxu0 0.0
    %330 = vmatmul.mubr.f32.gmra.mxu0 %v48
    %v331 = vpop.f32.mrf.mxu0
    %v332 = vadd.f32 %v131, %v331
    %v333 = vpop.f32.mrf.mxu0
    %v334 = vadd.f32 %v135, %v333
    %335 = vmatprep.mubr.f32.mxu0 0.0
    %336 = vmatmul.mubr.f32.gmra.mxu0 %v49
    %v337 = vpop.f32.mrf.mxu0
    %v338 = vadd.f32 %v131, %v337
    %v339 = vpop.f32.mrf.mxu0
    %v340 = vadd.f32 %v135, %v339
    %341 = vmatprep.mubr.f32.mxu0 0.0
    %342 = vmatmul.mubr.f32.gmra.mxu0 %v50
    %v343 = vpop.f32.mrf.mxu0
    %v344 = vadd.f32 %v131, %v343
    %v345 = vpop.f32.mrf.mxu0
    %v346 = vadd.f32 %v135, %v345
    %347 = vmatprep.mubr.f32.mxu0 0.0
    %348 = vmatmul.mubr.f32.gmra.mxu0 %v51
    %v349 = vpop.f32.mrf.mxu0
    %v350 = vadd.f32 %v131, %v349
    %v351 = vpop.f32.mrf.mxu0
    %v352 = vadd.f32 %v135, %v351
    %353 = vmatprep.mubr.f32.mxu0 0.0
    %354 = vmatmul.mubr.f32.gmra.mxu0 %v52
    %v355 = vpop.f32.mrf.mxu0
    %v356 = vadd.f32 %v131, %v355
    %v357 = vpop.f32.mrf.mxu0
    %v358 = vadd.f32 %v135, %v357
    %359 = vmatprep.mubr.f32.mxu0 0.0
    %360 = vmatmul.mubr.f32.gmra.mxu0 %v53
    %v361 = vpop.f32.mrf.mxu0
    %v362 = vadd.f32 %v131, %v361
    %v363 = vpop.f32.mrf.mxu0
    %v364 = vadd.f32 %v135, %v363
    %365 = vdwg.mxu0
    %366 = vst [vmem:[#allocation2] sm:$0xff] %v207
    %367 = vst [vmem:[#allocation2 + $0x8] sm:$0xff] %v209
    %368 = vst [vmem:[#allocation2 + $0x10] sm:$0xff] %v320
    %369 = vst [vmem:[#allocation2 + $0x18] sm:$0xff] %v322
    %370 = vst [vmem:[#allocation2 + $0x20] sm:$0xff] %v213
    %371 = vst [vmem:[#allocation2 + $0x28] sm:$0xff] %v215
    %372 = vst [vmem:[#allocation2 + $0x30] sm:$0xff] %v326
    %373 = vst [vmem:[#allocation2 + $0x38] sm:$0xff] %v328
    %374 = vst [vmem:[#allocation2 + $0x40] sm:$0xff] %v219
    %375 = vst [vmem:[#allocation2 + $0x48] sm:$0xff] %v221
    %376 = vst [vmem:[#allocation2 + $0x50] sm:$0xff] %v332
    %377 = vst [vmem:[#allocation2 + $0x58] sm:$0xff] %v334
    %378 = vst [vmem:[#allocation2 + $0x60] sm:$0xff] %v225
    %379 = vst [vmem:[#allocation2 + $0x68] sm:$0xff] %v227
    %380 = vst [vmem:[#allocation2 + $0x70] sm:$0xff] %v338
    %381 = vst [vmem:[#allocation2 + $0x78] sm:$0xff] %v340
    %382 = vst [vmem:[#allocation2 + $0x80] sm:$0xff] %v231
    %383 = vst [vmem:[#allocation2 + $0x88] sm:$0xff] %v233
    %384 = vst [vmem:[#allocation2 + $0x90] sm:$0xff] %v344
    %385 = vst [vmem:[#allocation2 + $0x98] sm:$0xff] %v346
    %386 = vst [vmem:[#allocation2 + $0xa0] sm:$0xff] %v237
    %387 = vst [vmem:[#allocation2 + $0xa8] sm:$0xff] %v239
    %388 = vst [vmem:[#allocation2 + $0xb0] sm:$0xff] %v350
    %389 = vst [vmem:[#allocation2 + $0xb8] sm:$0xff] %v352
    %390 = vst [vmem:[#allocation2 + $0xc0] sm:$0xff] %v243
    %391 = vst [vmem:[#allocation2 + $0xc8] sm:$0xff] %v245
    %392 = vst [vmem:[#allocation2 + $0xd0] sm:$0xff] %v356
    %393 = vst [vmem:[#allocation2 + $0xd8] sm:$0xff] %v358
    %394 = vst [vmem:[#allocation2 + $0xe0] sm:$0xff] %v249
    %395 = vst [vmem:[#allocation2 + $0xe8] sm:$0xff] %v251
    %396 = vst [vmem:[#allocation2 + $0xf0] sm:$0xff] %v362
    %397 = vst [vmem:[#allocation2 + $0xf8] sm:$0xff] %v364
    %v398 = vld [vmem:[#allocation4] sm:$0xff]
    %v399 = vld [vmem:[#allocation4 + $0x8] sm:$0xff]
    %v400 = vld [vmem:[#allocation4 + $0x10] sm:$0xff]
    %v401 = vld [vmem:[#allocation4 + $0x18] sm:$0xff]
    %v402 = vld [vmem:[#allocation4 + $0x20] sm:$0xff]
    %v403 = vld [vmem:[#allocation4 + $0x28] sm:$0xff]
    %v404 = vld [vmem:[#allocation4 + $0x30] sm:$0xff]
    %v405 = vld [vmem:[#allocation4 + $0x38] sm:$0xff]
    %v406 = vld [vmem:[#allocation4 + $0x40] sm:$0xff]
    %v407 = vld [vmem:[#allocation4 + $0x48] sm:$0xff]
    %v408 = vld [vmem:[#allocation4 + $0x50] sm:$0xff]
    %v409 = vld [vmem:[#allocation4 + $0x58] sm:$0xff]
    %v410 = vld [vmem:[#allocation4 + $0x60] sm:$0xff]
    %v411 = vld [vmem:[#allocation4 + $0x68] sm:$0xff]
    %v412 = vld [vmem:[#allocation4 + $0x70] sm:$0xff]
    %v413 = vld [vmem:[#allocation4 + $0x78] sm:$0xff]
    %v414 = vld [vmem:[#allocation4 + $0x80] sm:$0xff]
    %v415 = vld [vmem:[#allocation4 + $0x88] sm:$0xff]
    %v416 = vld [vmem:[#allocation4 + $0x90] sm:$0xff]
    %v417 = vld [vmem:[#allocation4 + $0x98] sm:$0xff]
    %v418 = vld [vmem:[#allocation4 + $0xa0] sm:$0xff]
    %v419 = vld [vmem:[#allocation4 + $0xa8] sm:$0xff]
    %v420 = vld [vmem:[#allocation4 + $0xb0] sm:$0xff]
    %v421 = vld [vmem:[#allocation4 + $0xb8] sm:$0xff]
    %v422 = vld [vmem:[#allocation4 + $0xc0] sm:$0xff]
    %v423 = vld [vmem:[#allocation4 + $0xc8] sm:$0xff]
    %v424 = vld [vmem:[#allocation4 + $0xd0] sm:$0xff]
    %v425 = vld [vmem:[#allocation4 + $0xd8] sm:$0xff]
    %v426 = vld [vmem:[#allocation4 + $0xe0] sm:$0xff]
    %v427 = vld [vmem:[#allocation4 + $0xe8] sm:$0xff]
    %v428 = vld [vmem:[#allocation4 + $0xf0] sm:$0xff]
    %v429 = vld [vmem:[#allocation4 + $0xf8] sm:$0xff]
    %v430 = vld [vmem:[#allocation4 + $0x100] sm:$0xff]
    %v431 = vld [vmem:[#allocation4 + $0x108] sm:$0xff]
    %v432 = vld [vmem:[#allocation4 + $0x110] sm:$0xff]
    %v433 = vld [vmem:[#allocation4 + $0x118] sm:$0xff]
    %v434 = vld [vmem:[#allocation4 + $0x120] sm:$0xff]
    %v435 = vld [vmem:[#allocation4 + $0x128] sm:$0xff]
    %v436 = vld [vmem:[#allocation4 + $0x130] sm:$0xff]
    %v437 = vld [vmem:[#allocation4 + $0x138] sm:$0xff]
    %v438 = vld [vmem:[#allocation4 + $0x140] sm:$0xff]
    %v439 = vld [vmem:[#allocation4 + $0x148] sm:$0xff]
    %v440 = vld [vmem:[#allocation4 + $0x150] sm:$0xff]
    %v441 = vld [vmem:[#allocation4 + $0x158] sm:$0xff]
    %v442 = vld [vmem:[#allocation4 + $0x160] sm:$0xff]
    %v443 = vld [vmem:[#allocation4 + $0x168] sm:$0xff]
    %v444 = vld [vmem:[#allocation4 + $0x170] sm:$0xff]
    %v445 = vld [vmem:[#allocation4 + $0x178] sm:$0xff]
    %v446 = vld [vmem:[#allocation4 + $0x180] sm:$0xff]
    %v447 = vld [vmem:[#allocation4 + $0x188] sm:$0xff]
    %v448 = vld [vmem:[#allocation4 + $0x190] sm:$0xff]
    %v449 = vld [vmem:[#allocation4 + $0x198] sm:$0xff]
    %v450 = vld [vmem:[#allocation4 + $0x1a0] sm:$0xff]
    %v451 = vld [vmem:[#allocation4 + $0x1a8] sm:$0xff]
    %v452 = vld [vmem:[#allocation4 + $0x1b0] sm:$0xff]
    %v453 = vld [vmem:[#allocation4 + $0x1b8] sm:$0xff]
    %v454 = vld [vmem:[#allocation4 + $0x1c0] sm:$0xff]
    %v455 = vld [vmem:[#allocation4 + $0x1c8] sm:$0xff]
    %v456 = vld [vmem:[#allocation4 + $0x1d0] sm:$0xff]
    %v457 = vld [vmem:[#allocation4 + $0x1d8] sm:$0xff]
    %v458 = vld [vmem:[#allocation4 + $0x1e0] sm:$0xff]
    %v459 = vld [vmem:[#allocation4 + $0x1e8] sm:$0xff]
    %v460 = vld [vmem:[#allocation4 + $0x1f0] sm:$0xff]
    %v461 = vld [vmem:[#allocation4 + $0x1f8] sm:$0xff]
    %v462 = vld [vmem:[%s1] sm:$0xff]
    %v463 = vld [vmem:[%s2] sm:$0xff]
    %v464 = vld [vmem:[#allocation2] sm:$0xff]
    %v465 = vld [vmem:[#allocation2 + $0x8] sm:$0xff]
    %v466 = vld [vmem:[#allocation2 + $0x10] sm:$0xff]
    %v467 = vld [vmem:[#allocation2 + $0x18] sm:$0xff]
    %468 = vmatprep.subr.mxu0 %v459
    %469 = vmatpush1.msra.mxu0 %v458
    %470 = vmatprep.subr.mxu0 %v455
    %471 = vmatpush1.msra.mxu0 %v454
    %472 = vmatprep.subr.mxu0 %v451
    %473 = vmatpush1.msra.mxu0 %v450
    %474 = vmatprep.subr.mxu0 %v447
    %475 = vmatpush1.msra.mxu0 %v446
    %476 = vmatprep.subr.mxu0 %v443
    %477 = vmatpush1.msra.mxu0 %v442
    %478 = vmatprep.subr.mxu0 %v439
    %479 = vmatpush1.msra.mxu0 %v438
    %480 = vmatprep.subr.mxu0 %v435
    %481 = vmatpush1.msra.mxu0 %v434
    %482 = vmatprep.subr.mxu0 %v431
    %483 = vmatpush1.msra.mxu0 %v430
    %484 = vmatprep.subr.mxu0 %v427
    %485 = vmatpush1.msra.mxu0 %v426
    %486 = vmatprep.subr.mxu0 %v423
    %487 = vmatpush1.msra.mxu0 %v422
    %488 = vmatprep.subr.mxu0 %v419
    %489 = vmatpush1.msra.mxu0 %v418
    %490 = vmatprep.subr.mxu0 %v415
    %491 = vmatpush1.msra.mxu0 %v414
    %492 = vmatprep.subr.mxu0 %v411
    %493 = vmatpush1.msra.mxu0 %v410
    %494 = vmatprep.subr.mxu0 %v407
    %495 = vmatpush1.msra.mxu0 %v406
    %496 = vmatprep.subr.mxu0 %v403
    %497 = vmatpush1.msra.mxu0 %v402
    %498 = vmatprep.subr.mxu0 %v399
    %499 = vmatpush1.msra.mxu0 %v398
    %500 = vmatprep.subr.mxu0 0.0
    %501 = vmatpush2.msra.mxu0 0.0
    %502 = vmatprep.subr.mxu0 0.0
    %503 = vmatpush2.msra.mxu0 0.0
    %504 = vmatprep.subr.mxu0 0.0
    %505 = vmatpush2.msra.mxu0 0.0
    %506 = vmatprep.subr.mxu0 0.0
    %507 = vmatpush2.msra.mxu0 0.0
    %508 = vmatprep.subr.mxu0 0.0
    %509 = vmatpush2.msra.mxu0 0.0
    %510 = vmatprep.subr.mxu0 0.0
    %511 = vmatpush2.msra.mxu0 0.0
    %512 = vmatprep.subr.mxu0 0.0
    %513 = vmatpush2.msra.mxu0 0.0
    %514 = vmatprep.subr.mxu0 0.0
    %515 = vmatpush2.msra.mxu0 0.0
    %516 = vmatprep.subr.mxu0 0.0
    %517 = vmatpush2.msra.mxu0 0.0
    %518 = vmatprep.subr.mxu0 0.0
    %519 = vmatpush2.msra.mxu0 0.0
    %520 = vmatprep.subr.mxu0 0.0
    %521 = vmatpush2.msra.mxu0 0.0
    %522 = vmatprep.subr.mxu0 0.0
    %523 = vmatpush2.msra.mxu0 0.0
    %524 = vmatprep.subr.mxu0 0.0
    %525 = vmatpush2.msra.mxu0 0.0
    %526 = vmatprep.subr.mxu0 0.0
    %527 = vmatpush2.msra.mxu0 0.0
    %528 = vmatprep.subr.mxu0 0.0
    %529 = vmatpush2.msra.mxu0 0.0
    %530 = vmatprep.subr.mxu0 0.0
    %531 = vmatpush2.msra.mxu0 0.0
    %532 = vmatprep.mubr.f32.mxu0 0.0
    %533 = vmatmul.mubr.f32.gmra.mxu0 %v462
    %v534 = vpop.f32.mrf.mxu0
    %v535 = vadd.f32 0.0, %v534
    %v536 = vpop.f32.mrf.mxu0
    %v537 = vadd.f32 0.0, %v536
    %538 = vdwg.mxu0
    %539 = vmatprep.subr.mxu0 %v461
    %540 = vmatpush1.msra.mxu0 %v460
    %541 = vmatprep.subr.mxu0 %v457
    %542 = vmatpush1.msra.mxu0 %v456
    %543 = vmatprep.subr.mxu0 %v453
    %544 = vmatpush1.msra.mxu0 %v452
    %545 = vmatprep.subr.mxu0 %v449
    %546 = vmatpush1.msra.mxu0 %v448
    %547 = vmatprep.subr.mxu0 %v445
    %548 = vmatpush1.msra.mxu0 %v444
    %549 = vmatprep.subr.mxu0 %v441
    %550 = vmatpush1.msra.mxu0 %v440
    %551 = vmatprep.subr.mxu0 %v437
    %552 = vmatpush1.msra.mxu0 %v436
    %553 = vmatprep.subr.mxu0 %v433
    %554 = vmatpush1.msra.mxu0 %v432
    %555 = vmatprep.subr.mxu0 %v429
    %556 = vmatpush1.msra.mxu0 %v428
    %557 = vmatprep.subr.mxu0 %v425
    %558 = vmatpush1.msra.mxu0 %v424
    %559 = vmatprep.subr.mxu0 %v421
    %560 = vmatpush1.msra.mxu0 %v420
    %561 = vmatprep.subr.mxu0 %v417
    %562 = vmatpush1.msra.mxu0 %v416
    %563 = vmatprep.subr.mxu0 %v413
    %564 = vmatpush1.msra.mxu0 %v412
    %565 = vmatprep.subr.mxu0 %v409
    %566 = vmatpush1.msra.mxu0 %v408
    %567 = vmatprep.subr.mxu0 %v405
    %568 = vmatpush1.msra.mxu0 %v404
    %569 = vmatprep.subr.mxu0 %v401
    %570 = vmatpush1.msra.mxu0 %v400
    %571 = vmatprep.subr.mxu0 0.0
    %572 = vmatpush2.msra.mxu0 0.0
    %573 = vmatprep.subr.mxu0 0.0
    %574 = vmatpush2.msra.mxu0 0.0
    %575 = vmatprep.subr.mxu0 0.0
    %576 = vmatpush2.msra.mxu0 0.0
    %577 = vmatprep.subr.mxu0 0.0
    %578 = vmatpush2.msra.mxu0 0.0
    %579 = vmatprep.subr.mxu0 0.0
    %580 = vmatpush2.msra.mxu0 0.0
    %581 = vmatprep.subr.mxu0 0.0
    %582 = vmatpush2.msra.mxu0 0.0
    %583 = vmatprep.subr.mxu0 0.0
    %584 = vmatpush2.msra.mxu0 0.0
    %585 = vmatprep.subr.mxu0 0.0
    %586 = vmatpush2.msra.mxu0 0.0
    %587 = vmatprep.subr.mxu0 0.0
    %588 = vmatpush2.msra.mxu0 0.0
    %589 = vmatprep.subr.mxu0 0.0
    %590 = vmatpush2.msra.mxu0 0.0
    %591 = vmatprep.subr.mxu0 0.0
    %592 = vmatpush2.msra.mxu0 0.0
    %593 = vmatprep.subr.mxu0 0.0
    %594 = vmatpush2.msra.mxu0 0.0
    %595 = vmatprep.subr.mxu0 0.0
    %596 = vmatpush2.msra.mxu0 0.0
    %597 = vmatprep.subr.mxu0 0.0
    %598 = vmatpush2.msra.mxu0 0.0
    %599 = vmatprep.subr.mxu0 0.0
    %600 = vmatpush2.msra.mxu0 0.0
    %601 = vmatprep.subr.mxu0 0.0
    %602 = vmatpush2.msra.mxu0 0.0
    %603 = vmatprep.mubr.f32.mxu0 0.0
    %604 = vmatmul.mubr.f32.gmra.mxu0 %v462
    %v605 = vpop.f32.mrf.mxu0
    %v606 = vadd.f32 0.0, %v605
    %v607 = vpop.f32.mrf.mxu0
    %v608 = vadd.f32 0.0, %v607
    %609 = vdwg.mxu0
    %v610 = vadd.f32 %v464, %v535
    %v611 = vadd.f32 %v465, %v537
    %v612 = vadd.f32 %v466, %v606
    %v613 = vadd.f32 %v467, %v608
    %v614 = vxor.u32 %v610, 2147483648
    %v615 = vmul.f32 %v614, 1.442695
    %v616 = vpow.pop %v615
    %v617 = vadd.f32 %v616, 1.0
    %v618 = vrcp.pop %v617
    %v619 = vmul.f32 1.0, %v618
    %v620 = vxor.u32 %v611, 2147483648
    %v621 = vmul.f32 %v620, 1.442695
    %v622 = vpow.pop %v621
    %v623 = vadd.f32 %v622, 1.0
    %v624 = vrcp.pop %v623
    %v625 = vmul.f32 1.0, %v624
    %v626 = vtanh.pop %v612
    %v627 = vxor.u32 %v613, 2147483648
    %v628 = vmul.f32 %v627, 1.442695
    %v629 = vpow.pop %v628
    %v630 = vadd.f32 %v629, 1.0
    %v631 = vrcp.pop %v630
    %v632 = vmul.f32 1.0, %v631
    %v633 = vmul.f32 %v625, %v463
    %v634 = vmul.f32 %v619, %v626
    %v635 = vadd.f32 %v633, %v634
    %v636 = vtanh.pop %v635
    %v637 = vmul.f32 %v632, %v636
    %638 = vst [vmem:[#allocation3] sm:$0xff] %v637
    %s639 = scalar_lea.vmem [#allocation2], 32
    %v640 = vld [vmem:[%s639] sm:$0xff]
    %v641 = vld [vmem:[%s639 + $0x8] sm:$0xff]
    %v642 = vld [vmem:[%s639 + $0x10] sm:$0xff]
    %v643 = vld [vmem:[%s639 + $0x18] sm:$0xff]
    %644 = vmatprep.subr.mxu0 %v459
    %645 = vmatpush1.msra.mxu0 %v458
    %646 = vmatprep.subr.mxu0 %v455
    %647 = vmatpush1.msra.mxu0 %v454
    %648 = vmatprep.subr.mxu0 %v451
    %649 = vmatpush1.msra.mxu0 %v450
    %650 = vmatprep.subr.mxu0 %v447
    %651 = vmatpush1.msra.mxu0 %v446
    %652 = vmatprep.subr.mxu0 %v443
    %653 = vmatpush1.msra.mxu0 %v442
    %654 = vmatprep.subr.mxu0 %v439
    %655 = vmatpush1.msra.mxu0 %v438
    %656 = vmatprep.subr.mxu0 %v435
    %657 = vmatpush1.msra.mxu0 %v434
    %658 = vmatprep.subr.mxu0 %v431
    %659 = vmatpush1.msra.mxu0 %v430
    %660 = vmatprep.subr.mxu0 %v427
    %661 = vmatpush1.msra.mxu0 %v426
    %662 = vmatprep.subr.mxu0 %v423
    %663 = vmatpush1.msra.mxu0 %v422
    %664 = vmatprep.subr.mxu0 %v419
    %665 = vmatpush1.msra.mxu0 %v418
    %666 = vmatprep.subr.mxu0 %v415
    %667 = vmatpush1.msra.mxu0 %v414
    %668 = vmatprep.subr.mxu0 %v411
    %669 = vmatpush1.msra.mxu0 %v410
    %670 = vmatprep.subr.mxu0 %v407
    %671 = vmatpush1.msra.mxu0 %v406
    %672 = vmatprep.subr.mxu0 %v403
    %673 = vmatpush1.msra.mxu0 %v402
    %674 = vmatprep.subr.mxu0 %v399
    %675 = vmatpush1.msra.mxu0 %v398
    %676 = vmatprep.subr.mxu0 0.0
    %677 = vmatpush2.msra.mxu0 0.0
    %678 = vmatprep.subr.mxu0 0.0
    %679 = vmatpush2.msra.mxu0 0.0
    %680 = vmatprep.subr.mxu0 0.0
    %681 = vmatpush2.msra.mxu0 0.0
    %682 = vmatprep.subr.mxu0 0.0
    %683 = vmatpush2.msra.mxu0 0.0
    %684 = vmatprep.subr.mxu0 0.0
    %685 = vmatpush2.msra.mxu0 0.0
    %686 = vmatprep.subr.mxu0 0.0
    %687 = vmatpush2.msra.mxu0 0.0
    %688 = vmatprep.subr.mxu0 0.0
    %689 = vmatpush2.msra.mxu0 0.0
    %690 = vmatprep.subr.mxu0 0.0
    %691 = vmatpush2.msra.mxu0 0.0
    %692 = vmatprep.subr.mxu0 0.0
    %693 = vmatpush2.msra.mxu0 0.0
    %694 = vmatprep.subr.mxu0 0.0
    %695 = vmatpush2.msra.mxu0 0.0
    %696 = vmatprep.subr.mxu0 0.0
    %697 = vmatpush2.msra.mxu0 0.0
    %698 = vmatprep.subr.mxu0 0.0
    %699 = vmatpush2.msra.mxu0 0.0
    %700 = vmatprep.subr.mxu0 0.0
    %701 = vmatpush2.msra.mxu0 0.0
    %702 = vmatprep.subr.mxu0 0.0
    %703 = vmatpush2.msra.mxu0 0.0
    %704 = vmatprep.subr.mxu0 0.0
    %705 = vmatpush2.msra.mxu0 0.0
    %706 = vmatprep.subr.mxu0 0.0
    %707 = vmatpush2.msra.mxu0 0.0
    %708 = vmatprep.mubr.f32.mxu0 0.0
    %709 = vmatmul.mubr.f32.gmra.mxu0 %v637
    %v710 = vpop.f32.mrf.mxu0
    %v711 = vadd.f32 0.0, %v710
    %v712 = vpop.f32.mrf.mxu0
    %v713 = vadd.f32 0.0, %v712
    %714 = vdwg.mxu0
    %715 = vmatprep.subr.mxu0 %v461
    %716 = vmatpush1.msra.mxu0 %v460
    %717 = vmatprep.subr.mxu0 %v457
    %718 = vmatpush1.msra.mxu0 %v456
    %719 = vmatprep.subr.mxu0 %v453
    %720 = vmatpush1.msra.mxu0 %v452
    %721 = vmatprep.subr.mxu0 %v449
    %722 = vmatpush1.msra.mxu0 %v448
    %723 = vmatprep.subr.mxu0 %v445
    %724 = vmatpush1.msra.mxu0 %v444
    %725 = vmatprep.subr.mxu0 %v441
    %726 = vmatpush1.msra.mxu0 %v440
    %727 = vmatprep.subr.mxu0 %v437
    %728 = vmatpush1.msra.mxu0 %v436
    %729 = vmatprep.subr.mxu0 %v433
    %730 = vmatpush1.msra.mxu0 %v432
    %731 = vmatprep.subr.mxu0 %v429
    %732 = vmatpush1.msra.mxu0 %v428
    %733 = vmatprep.subr.mxu0 %v425
    %734 = vmatpush1.msra.mxu0 %v424
    %735 = vmatprep.subr.mxu0 %v421
    %736 = vmatpush1.msra.mxu0 %v420
    %737 = vmatprep.subr.mxu0 %v417
    %738 = vmatpush1.msra.mxu0 %v416
    %739 = vmatprep.subr.mxu0 %v413
    %740 = vmatpush1.msra.mxu0 %v412
    %741 = vmatprep.subr.mxu0 %v409
    %742 = vmatpush1.msra.mxu0 %v408
    %743 = vmatprep.subr.mxu0 %v405
    %744 = vmatpush1.msra.mxu0 %v404
    %745 = vmatprep.subr.mxu0 %v401
    %746 = vmatpush1.msra.mxu0 %v400
    %747 = vmatprep.subr.mxu0 0.0
    %748 = vmatpush2.msra.mxu0 0.0
    %749 = vmatprep.subr.mxu0 0.0
    %750 = vmatpush2.msra.mxu0 0.0
    %751 = vmatprep.subr.mxu0 0.0
    %752 = vmatpush2.msra.mxu0 0.0
    %753 = vmatprep.subr.mxu0 0.0
    %754 = vmatpush2.msra.mxu0 0.0
    %755 = vmatprep.subr.mxu0 0.0
    %756 = vmatpush2.msra.mxu0 0.0
    %757 = vmatprep.subr.mxu0 0.0
    %758 = vmatpush2.msra.mxu0 0.0
    %759 = vmatprep.subr.mxu0 0.0
    %760 = vmatpush2.msra.mxu0 0.0
    %761 = vmatprep.subr.mxu0 0.0
    %762 = vmatpush2.msra.mxu0 0.0
    %763 = vmatprep.subr.mxu0 0.0
    %764 = vmatpush2.msra.mxu0 0.0
    %765 = vmatprep.subr.mxu0 0.0
    %766 = vmatpush2.msra.mxu0 0.0
    %767 = vmatprep.subr.mxu0 0.0
    %768 = vmatpush2.msra.mxu0 0.0
    %769 = vmatprep.subr.mxu0 0.0
    %770 = vmatpush2.msra.mxu0 0.0
    %771 = vmatprep.subr.mxu0 0.0
    %772 = vmatpush2.msra.mxu0 0.0
    %773 = vmatprep.subr.mxu0 0.0
    %774 = vmatpush2.msra.mxu0 0.0
    %775 = vmatprep.subr.mxu0 0.0
    %776 = vmatpush2.msra.mxu0 0.0
    %777 = vmatprep.subr.mxu0 0.0
    %778 = vmatpush2.msra.mxu0 0.0
    %779 = vmatprep.mubr.f32.mxu0 0.0
    %780 = vmatmul.mubr.f32.gmra.mxu0 %v637
    %v781 = vpop.f32.mrf.mxu0
    %v782 = vadd.f32 0.0, %v781
    %v783 = vpop.f32.mrf.mxu0
    %v784 = vadd.f32 0.0, %v783
    %785 = vdwg.mxu0
    %v786 = vadd.f32 %v640, %v711
    %v787 = vadd.f32 %v641, %v713
    %v788 = vadd.f32 %v642, %v782
    %v789 = vadd.f32 %v643, %v784
    %v790 = vxor.u32 %v786, 2147483648
    %v791 = vmul.f32 %v790, 1.442695
    %v792 = vpow.pop %v791
    %v793 = vadd.f32 %v792, 1.0
    %v794 = vrcp.pop %v793
    %v795 = vmul.f32 1.0, %v794
    %v796 = vxor.u32 %v787, 2147483648
    %v797 = vmul.f32 %v796, 1.442695
    %v798 = vpow.pop %v797
    %v799 = vadd.f32 %v798, 1.0
    %v800 = vrcp.pop %v799
    %v801 = vmul.f32 1.0, %v800
    %v802 = vtanh.pop %v788
    %v803 = vxor.u32 %v789, 2147483648
    %v804 = vmul.f32 %v803, 1.442695
    %v805 = vpow.pop %v804
    %v806 = vadd.f32 %v805, 1.0
    %v807 = vrcp.pop %v806
    %v808 = vmul.f32 1.0, %v807
    %v809 = vmul.f32 %v801, %v635
    %v810 = vmul.f32 %v795, %v802
    %v811 = vadd.f32 %v809, %v810
    %v812 = vtanh.pop %v811
    %v813 = vmul.f32 %v808, %v812
    %s814 = scalar_lea.vmem [#allocation3], 8
    %815 = vst [vmem:[%s814] sm:$0xff] %v813
    %s816 = scalar_lea.vmem [#allocation2], 64
    %v817 = vld [vmem:[%s816] sm:$0xff]
    %v818 = vld [vmem:[%s816 + $0x8] sm:$0xff]
    %v819 = vld [vmem:[%s816 + $0x10] sm:$0xff]
    %v820 = vld [vmem:[%s816 + $0x18] sm:$0xff]
    %821 = vmatprep.subr.mxu0 %v459
    %822 = vmatpush1.msra.mxu0 %v458
    %823 = vmatprep.subr.mxu0 %v455
    %824 = vmatpush1.msra.mxu0 %v454
    %825 = vmatprep.subr.mxu0 %v451
    %826 = vmatpush1.msra.mxu0 %v450
    %827 = vmatprep.subr.mxu0 %v447
    %828 = vmatpush1.msra.mxu0 %v446
    %829 = vmatprep.subr.mxu0 %v443
    %830 = vmatpush1.msra.mxu0 %v442
    %831 = vmatprep.subr.mxu0 %v439
    %832 = vmatpush1.msra.mxu0 %v438
    %833 = vmatprep.subr.mxu0 %v435
    %834 = vmatpush1.msra.mxu0 %v434
    %835 = vmatprep.subr.mxu0 %v431
    %836 = vmatpush1.msra.mxu0 %v430
    %837 = vmatprep.subr.mxu0 %v427
    %838 = vmatpush1.msra.mxu0 %v426
    %839 = vmatprep.subr.mxu0 %v423
    %840 = vmatpush1.msra.mxu0 %v422
    %841 = vmatprep.subr.mxu0 %v419
    %842 = vmatpush1.msra.mxu0 %v418
    %843 = vmatprep.subr.mxu0 %v415
    %844 = vmatpush1.msra.mxu0 %v414
    %845 = vmatprep.subr.mxu0 %v411
    %846 = vmatpush1.msra.mxu0 %v410
    %847 = vmatprep.subr.mxu0 %v407
    %848 = vmatpush1.msra.mxu0 %v406
    %849 = vmatprep.subr.mxu0 %v403
    %850 = vmatpush1.msra.mxu0 %v402
    %851 = vmatprep.subr.mxu0 %v399
    %852 = vmatpush1.msra.mxu0 %v398
    %853 = vmatprep.subr.mxu0 0.0
    %854 = vmatpush2.msra.mxu0 0.0
    %855 = vmatprep.subr.mxu0 0.0
    %856 = vmatpush2.msra.mxu0 0.0
    %857 = vmatprep.subr.mxu0 0.0
    %858 = vmatpush2.msra.mxu0 0.0
    %859 = vmatprep.subr.mxu0 0.0
    %860 = vmatpush2.msra.mxu0 0.0
    %861 = vmatprep.subr.mxu0 0.0
    %862 = vmatpush2.msra.mxu0 0.0
    %863 = vmatprep.subr.mxu0 0.0
    %864 = vmatpush2.msra.mxu0 0.0
    %865 = vmatprep.subr.mxu0 0.0
    %866 = vmatpush2.msra.mxu0 0.0
    %867 = vmatprep.subr.mxu0 0.0
    %868 = vmatpush2.msra.mxu0 0.0
    %869 = vmatprep.subr.mxu0 0.0
    %870 = vmatpush2.msra.mxu0 0.0
    %871 = vmatprep.subr.mxu0 0.0
    %872 = vmatpush2.msra.mxu0 0.0
    %873 = vmatprep.subr.mxu0 0.0
    %874 = vmatpush2.msra.mxu0 0.0
    %875 = vmatprep.subr.mxu0 0.0
    %876 = vmatpush2.msra.mxu0 0.0
    %877 = vmatprep.subr.mxu0 0.0
    %878 = vmatpush2.msra.mxu0 0.0
    %879 = vmatprep.subr.mxu0 0.0
    %880 = vmatpush2.msra.mxu0 0.0
    %881 = vmatprep.subr.mxu0 0.0
    %882 = vmatpush2.msra.mxu0 0.0
    %883 = vmatprep.subr.mxu0 0.0
    %884 = vmatpush2.msra.mxu0 0.0
    %885 = vmatprep.mubr.f32.mxu0 0.0
    %886 = vmatmul.mubr.f32.gmra.mxu0 %v813
    %v887 = vpop.f32.mrf.mxu0
    %v888 = vadd.f32 0.0, %v887
    %v889 = vpop.f32.mrf.mxu0
    %v890 = vadd.f32 0.0, %v889
    %891 = vdwg.mxu0
    %892 = vmatprep.subr.mxu0 %v461
    %893 = vmatpush1.msra.mxu0 %v460
    %894 = vmatprep.subr.mxu0 %v457
    %895 = vmatpush1.msra.mxu0 %v456
    %896 = vmatprep.subr.mxu0 %v453
    %897 = vmatpush1.msra.mxu0 %v452
    %898 = vmatprep.subr.mxu0 %v449
    %899 = vmatpush1.msra.mxu0 %v448
    %900 = vmatprep.subr.mxu0 %v445
    %901 = vmatpush1.msra.mxu0 %v444
    %902 = vmatprep.subr.mxu0 %v441
    %903 = vmatpush1.msra.mxu0 %v440
    %904 = vmatprep.subr.mxu0 %v437
    %905 = vmatpush1.msra.mxu0 %v436
    %906 = vmatprep.subr.mxu0 %v433
    %907 = vmatpush1.msra.mxu0 %v432
    %908 = vmatprep.subr.mxu0 %v429
    %909 = vmatpush1.msra.mxu0 %v428
    %910 = vmatprep.subr.mxu0 %v425
    %911 = vmatpush1.msra.mxu0 %v424
    %912 = vmatprep.subr.mxu0 %v421
    %913 = vmatpush1.msra.mxu0 %v420
    %914 = vmatprep.subr.mxu0 %v417
    %915 = vmatpush1.msra.mxu0 %v416
    %916 = vmatprep.subr.mxu0 %v413
    %917 = vmatpush1.msra.mxu0 %v412
    %918 = vmatprep.subr.mxu0 %v409
    %919 = vmatpush1.msra.mxu0 %v408
    %920 = vmatprep.subr.mxu0 %v405
    %921 = vmatpush1.msra.mxu0 %v404
    %922 = vmatprep.subr.mxu0 %v401
    %923 = vmatpush1.msra.mxu0 %v400
    %924 = vmatprep.subr.mxu0 0.0
    %925 = vmatpush2.msra.mxu0 0.0
    %926 = vmatprep.subr.mxu0 0.0
    %927 = vmatpush2.msra.mxu0 0.0
    %928 = vmatprep.subr.mxu0 0.0
    %929 = vmatpush2.msra.mxu0 0.0
    %930 = vmatprep.subr.mxu0 0.0
    %931 = vmatpush2.msra.mxu0 0.0
    %932 = vmatprep.subr.mxu0 0.0
    %933 = vmatpush2.msra.mxu0 0.0
    %934 = vmatprep.subr.mxu0 0.0
    %935 = vmatpush2.msra.mxu0 0.0
    %936 = vmatprep.subr.mxu0 0.0
    %937 = vmatpush2.msra.mxu0 0.0
    %938 = vmatprep.subr.mxu0 0.0
    %939 = vmatpush2.msra.mxu0 0.0
    %940 = vmatprep.subr.mxu0 0.0
    %941 = vmatpush2.msra.mxu0 0.0
    %942 = vmatprep.subr.mxu0 0.0
    %943 = vmatpush2.msra.mxu0 0.0
    %944 = vmatprep.subr.mxu0 0.0
    %945 = vmatpush2.msra.mxu0 0.0
    %946 = vmatprep.subr.mxu0 0.0
    %947 = vmatpush2.msra.mxu0 0.0
    %948 = vmatprep.subr.mxu0 0.0
    %949 = vmatpush2.msra.mxu0 0.0
    %950 = vmatprep.subr.mxu0 0.0
    %951 = vmatpush2.msra.mxu0 0.0
    %952 = vmatprep.subr.mxu0 0.0
    %953 = vmatpush2.msra.mxu0 0.0
    %954 = vmatprep.subr.mxu0 0.0
    %955 = vmatpush2.msra.mxu0 0.0
    %956 = vmatprep.mubr.f32.mxu0 0.0
    %957 = vmatmul.mubr.f32.gmra.mxu0 %v813
    %v958 = vpop.f32.mrf.mxu0
    %v959 = vadd.f32 0.0, %v958
    %v960 = vpop.f32.mrf.mxu0
    %v961 = vadd.f32 0.0, %v960
    %962 = vdwg.mxu0
    %v963 = vadd.f32 %v817, %v888
    %v964 = vadd.f32 %v818, %v890
    %v965 = vadd.f32 %v819, %v959
    %v966 = vadd.f32 %v820, %v961
    %v967 = vxor.u32 %v963, 2147483648
    %v968 = vmul.f32 %v967, 1.442695
    %v969 = vpow.pop %v968
    %v970 = vadd.f32 %v969, 1.0
    %v971 = vrcp.pop %v970
    %v972 = vmul.f32 1.0, %v971
    %v973 = vxor.u32 %v964, 2147483648
    %v974 = vmul.f32 %v973, 1.442695
    %v975 = vpow.pop %v974
    %v976 = vadd.f32 %v975, 1.0
    %v977 = vrcp.pop %v976
    %v978 = vmul.f32 1.0, %v977
    %v979 = vtanh.pop %v965
    %v980 = vxor.u32 %v966, 2147483648
    %v981 = vmul.f32 %v980, 1.442695
    %v982 = vpow.pop %v981
    %v983 = vadd.f32 %v982, 1.0
    %v984 = vrcp.pop %v983
    %v985 = vmul.f32 1.0, %v984
    %v986 = vmul.f32 %v978, %v811
    %v987 = vmul.f32 %v972, %v979
    %v988 = vadd.f32 %v986, %v987
    %v989 = vtanh.pop %v988
    %v990 = vmul.f32 %v985, %v989
    %s991 = scalar_lea.vmem [#allocation3], 16
    %992 = vst [vmem:[%s991] sm:$0xff] %v990
    %s993 = scalar_lea.vmem [#allocation2], 96
    %v994 = vld [vmem:[%s993] sm:$0xff]
    %v995 = vld [vmem:[%s993 + $0x8] sm:$0xff]
    %v996 = vld [vmem:[%s993 + $0x10] sm:$0xff]
    %v997 = vld [vmem:[%s993 + $0x18] sm:$0xff]
    %998 = vmatprep.subr.mxu0 %v459
    %999 = vmatpush1.msra.mxu0 %v458
    %1000 = vmatprep.subr.mxu0 %v455
    %1001 = vmatpush1.msra.mxu0 %v454
    %1002 = vmatprep.subr.mxu0 %v451
    %1003 = vmatpush1.msra.mxu0 %v450
    %1004 = vmatprep.subr.mxu0 %v447
    %1005 = vmatpush1.msra.mxu0 %v446
    %1006 = vmatprep.subr.mxu0 %v443
    %1007 = vmatpush1.msra.mxu0 %v442
    %1008 = vmatprep.subr.mxu0 %v439
    %1009 = vmatpush1.msra.mxu0 %v438
    %1010 = vmatprep.subr.mxu0 %v435
    %1011 = vmatpush1.msra.mxu0 %v434
    %1012 = vmatprep.subr.mxu0 %v431
    %1013 = vmatpush1.msra.mxu0 %v430
    %1014 = vmatprep.subr.mxu0 %v427
    %1015 = vmatpush1.msra.mxu0 %v426
    %1016 = vmatprep.subr.mxu0 %v423
    %1017 = vmatpush1.msra.mxu0 %v422
    %1018 = vmatprep.subr.mxu0 %v419
    %1019 = vmatpush1.msra.mxu0 %v418
    %1020 = vmatprep.subr.mxu0 %v415
    %1021 = vmatpush1.msra.mxu0 %v414
    %1022 = vmatprep.subr.mxu0 %v411
    %1023 = vmatpush1.msra.mxu0 %v410
    %1024 = vmatprep.subr.mxu0 %v407
    %1025 = vmatpush1.msra.mxu0 %v406
    %1026 = vmatprep.subr.mxu0 %v403
    %1027 = vmatpush1.msra.mxu0 %v402
    %1028 = vmatprep.subr.mxu0 %v399
    %1029 = vmatpush1.msra.mxu0 %v398
    %1030 = vmatprep.subr.mxu0 0.0
    %1031 = vmatpush2.msra.mxu0 0.0
    %1032 = vmatprep.subr.mxu0 0.0
    %1033 = vmatpush2.msra.mxu0 0.0
    %1034 = vmatprep.subr.mxu0 0.0
    %1035 = vmatpush2.msra.mxu0 0.0
    %1036 = vmatprep.subr.mxu0 0.0
    %1037 = vmatpush2.msra.mxu0 0.0
    %1038 = vmatprep.subr.mxu0 0.0
    %1039 = vmatpush2.msra.mxu0 0.0
    %1040 = vmatprep.subr.mxu0 0.0
    %1041 = vmatpush2.msra.mxu0 0.0
    %1042 = vmatprep.subr.mxu0 0.0
    %1043 = vmatpush2.msra.mxu0 0.0
    %1044 = vmatprep.subr.mxu0 0.0
    %1045 = vmatpush2.msra.mxu0 0.0
    %1046 = vmatprep.subr.mxu0 0.0
    %1047 = vmatpush2.msra.mxu0 0.0
    %1048 = vmatprep.subr.mxu0 0.0
    %1049 = vmatpush2.msra.mxu0 0.0
    %1050 = vmatprep.subr.mxu0 0.0
    %1051 = vmatpush2.msra.mxu0 0.0
    %1052 = vmatprep.subr.mxu0 0.0
    %1053 = vmatpush2.msra.mxu0 0.0
    %1054 = vmatprep.subr.mxu0 0.0
    %1055 = vmatpush2.msra.mxu0 0.0
    %1056 = vmatprep.subr.mxu0 0.0
    %1057 = vmatpush2.msra.mxu0 0.0
    %1058 = vmatprep.subr.mxu0 0.0
    %1059 = vmatpush2.msra.mxu0 0.0
    %1060 = vmatprep.subr.mxu0 0.0
    %1061 = vmatpush2.msra.mxu0 0.0
    %1062 = vmatprep.mubr.f32.mxu0 0.0
    %1063 = vmatmul.mubr.f32.gmra.mxu0 %v990
    %v1064 = vpop.f32.mrf.mxu0
    %v1065 = vadd.f32 0.0, %v1064
    %v1066 = vpop.f32.mrf.mxu0
    %v1067 = vadd.f32 0.0, %v1066
    %1068 = vdwg.mxu0
    %1069 = vmatprep.subr.mxu0 %v461
    %1070 = vmatpush1.msra.mxu0 %v460
    %1071 = vmatprep.subr.mxu0 %v457
    %1072 = vmatpush1.msra.mxu0 %v456
    %1073 = vmatprep.subr.mxu0 %v453
    %1074 = vmatpush1.msra.mxu0 %v452
    %1075 = vmatprep.subr.mxu0 %v449
    %1076 = vmatpush1.msra.mxu0 %v448
    %1077 = vmatprep.subr.mxu0 %v445
    %1078 = vmatpush1.msra.mxu0 %v444
    %1079 = vmatprep.subr.mxu0 %v441
    %1080 = vmatpush1.msra.mxu0 %v440
    %1081 = vmatprep.subr.mxu0 %v437
    %1082 = vmatpush1.msra.mxu0 %v436
    %1083 = vmatprep.subr.mxu0 %v433
    %1084 = vmatpush1.msra.mxu0 %v432
    %1085 = vmatprep.subr.mxu0 %v429
    %1086 = vmatpush1.msra.mxu0 %v428
    %1087 = vmatprep.subr.mxu0 %v425
    %1088 = vmatpush1.msra.mxu0 %v424
    %1089 = vmatprep.subr.mxu0 %v421
    %1090 = vmatpush1.msra.mxu0 %v420
    %1091 = vmatprep.subr.mxu0 %v417
    %1092 = vmatpush1.msra.mxu0 %v416
    %1093 = vmatprep.subr.mxu0 %v413
    %1094 = vmatpush1.msra.mxu0 %v412
    %1095 = vmatprep.subr.mxu0 %v409
    %1096 = vmatpush1.msra.mxu0 %v408
    %1097 = vmatprep.subr.mxu0 %v405
    %1098 = vmatpush1.msra.mxu0 %v404
    %1099 = vmatprep.subr.mxu0 %v401
    %1100 = vmatpush1.msra.mxu0 %v400
    %1101 = vmatprep.subr.mxu0 0.0
    %1102 = vmatpush2.msra.mxu0 0.0
    %1103 = vmatprep.subr.mxu0 0.0
    %1104 = vmatpush2.msra.mxu0 0.0
    %1105 = vmatprep.subr.mxu0 0.0
    %1106 = vmatpush2.msra.mxu0 0.0
    %1107 = vmatprep.subr.mxu0 0.0
    %1108 = vmatpush2.msra.mxu0 0.0
    %1109 = vmatprep.subr.mxu0 0.0
    %1110 = vmatpush2.msra.mxu0 0.0
    %1111 = vmatprep.subr.mxu0 0.0
    %1112 = vmatpush2.msra.mxu0 0.0
    %1113 = vmatprep.subr.mxu0 0.0
    %1114 = vmatpush2.msra.mxu0 0.0
    %1115 = vmatprep.subr.mxu0 0.0
    %1116 = vmatpush2.msra.mxu0 0.0
    %1117 = vmatprep.subr.mxu0 0.0
    %1118 = vmatpush2.msra.mxu0 0.0
    %1119 = vmatprep.subr.mxu0 0.0
    %1120 = vmatpush2.msra.mxu0 0.0
    %1121 = vmatprep.subr.mxu0 0.0
    %1122 = vmatpush2.msra.mxu0 0.0
    %1123 = vmatprep.subr.mxu0 0.0
    %1124 = vmatpush2.msra.mxu0 0.0
    %1125 = vmatprep.subr.mxu0 0.0
    %1126 = vmatpush2.msra.mxu0 0.0
    %1127 = vmatprep.subr.mxu0 0.0
    %1128 = vmatpush2.msra.mxu0 0.0
    %1129 = vmatprep.subr.mxu0 0.0
    %1130 = vmatpush2.msra.mxu0 0.0
    %1131 = vmatprep.subr.mxu0 0.0
    %1132 = vmatpush2.msra.mxu0 0.0
    %1133 = vmatprep.mubr.f32.mxu0 0.0
    %1134 = vmatmul.mubr.f32.gmra.mxu0 %v990
    %v1135 = vpop.f32.mrf.mxu0
    %v1136 = vadd.f32 0.0, %v1135
    %v1137 = vpop.f32.mrf.mxu0
    %v1138 = vadd.f32 0.0, %v1137
    %1139 = vdwg.mxu0
    %v1140 = vadd.f32 %v994, %v1065
    %v1141 = vadd.f32 %v995, %v1067
    %v1142 = vadd.f32 %v996, %v1136
    %v1143 = vadd.f32 %v997, %v1138
    %v1144 = vxor.u32 %v1140, 2147483648
    %v1145 = vmul.f32 %v1144, 1.442695
    %v1146 = vpow.pop %v1145
    %v1147 = vadd.f32 %v1146, 1.0
    %v1148 = vrcp.pop %v1147
    %v1149 = vmul.f32 1.0, %v1148
    %v1150 = vxor.u32 %v1141, 2147483648
    %v1151 = vmul.f32 %v1150, 1.442695
    %v1152 = vpow.pop %v1151
    %v1153 = vadd.f32 %v1152, 1.0
    %v1154 = vrcp.pop %v1153
    %v1155 = vmul.f32 1.0, %v1154
    %v1156 = vtanh.pop %v1142
    %v1157 = vxor.u32 %v1143, 2147483648
    %v1158 = vmul.f32 %v1157, 1.442695
    %v1159 = vpow.pop %v1158
    %v1160 = vadd.f32 %v1159, 1.0
    %v1161 = vrcp.pop %v1160
    %v1162 = vmul.f32 1.0, %v1161
    %v1163 = vmul.f32 %v1155, %v988
    %v1164 = vmul.f32 %v1149, %v1156
    %v1165 = vadd.f32 %v1163, %v1164
    %v1166 = vtanh.pop %v1165
    %v1167 = vmul.f32 %v1162, %v1166
    %s1168 = scalar_lea.vmem [#allocation3], 24
    %1169 = vst [vmem:[%s1168] sm:$0xff] %v1167
    %s1170 = scalar_lea.vmem [#allocation2], 128
    %v1171 = vld [vmem:[%s1170] sm:$0xff]
    %v1172 = vld [vmem:[%s1170 + $0x8] sm:$0xff]
    %v1173 = vld [vmem:[%s1170 + $0x10] sm:$0xff]
    %v1174 = vld [vmem:[%s1170 + $0x18] sm:$0xff]
    %1175 = vmatprep.subr.mxu0 %v459
    %1176 = vmatpush1.msra.mxu0 %v458
    %1177 = vmatprep.subr.mxu0 %v455
    %1178 = vmatpush1.msra.mxu0 %v454
    %1179 = vmatprep.subr.mxu0 %v451
    %1180 = vmatpush1.msra.mxu0 %v450
    %1181 = vmatprep.subr.mxu0 %v447
    %1182 = vmatpush1.msra.mxu0 %v446
    %1183 = vmatprep.subr.mxu0 %v443
    %1184 = vmatpush1.msra.mxu0 %v442
    %1185 = vmatprep.subr.mxu0 %v439
    %1186 = vmatpush1.msra.mxu0 %v438
    %1187 = vmatprep.subr.mxu0 %v435
    %1188 = vmatpush1.msra.mxu0 %v434
    %1189 = vmatprep.subr.mxu0 %v431
    %1190 = vmatpush1.msra.mxu0 %v430
    %1191 = vmatprep.subr.mxu0 %v427
    %1192 = vmatpush1.msra.mxu0 %v426
    %1193 = vmatprep.subr.mxu0 %v423
    %1194 = vmatpush1.msra.mxu0 %v422
    %1195 = vmatprep.subr.mxu0 %v419
    %1196 = vmatpush1.msra.mxu0 %v418
    %1197 = vmatprep.subr.mxu0 %v415
    %1198 = vmatpush1.msra.mxu0 %v414
    %1199 = vmatprep.subr.mxu0 %v411
    %1200 = vmatpush1.msra.mxu0 %v410
    %1201 = vmatprep.subr.mxu0 %v407
    %1202 = vmatpush1.msra.mxu0 %v406
    %1203 = vmatprep.subr.mxu0 %v403
    %1204 = vmatpush1.msra.mxu0 %v402
    %1205 = vmatprep.subr.mxu0 %v399
    %1206 = vmatpush1.msra.mxu0 %v398
    %1207 = vmatprep.subr.mxu0 0.0
    %1208 = vmatpush2.msra.mxu0 0.0
    %1209 = vmatprep.subr.mxu0 0.0
    %1210 = vmatpush2.msra.mxu0 0.0
    %1211 = vmatprep.subr.mxu0 0.0
    %1212 = vmatpush2.msra.mxu0 0.0
    %1213 = vmatprep.subr.mxu0 0.0
    %1214 = vmatpush2.msra.mxu0 0.0
    %1215 = vmatprep.subr.mxu0 0.0
    %1216 = vmatpush2.msra.mxu0 0.0
    %1217 = vmatprep.subr.mxu0 0.0
    %1218 = vmatpush2.msra.mxu0 0.0
    %1219 = vmatprep.subr.mxu0 0.0
    %1220 = vmatpush2.msra.mxu0 0.0
    %1221 = vmatprep.subr.mxu0 0.0
    %1222 = vmatpush2.msra.mxu0 0.0
    %1223 = vmatprep.subr.mxu0 0.0
    %1224 = vmatpush2.msra.mxu0 0.0
    %1225 = vmatprep.subr.mxu0 0.0
    %1226 = vmatpush2.msra.mxu0 0.0
    %1227 = vmatprep.subr.mxu0 0.0
    %1228 = vmatpush2.msra.mxu0 0.0
    %1229 = vmatprep.subr.mxu0 0.0
    %1230 = vmatpush2.msra.mxu0 0.0
    %1231 = vmatprep.subr.mxu0 0.0
    %1232 = vmatpush2.msra.mxu0 0.0
    %1233 = vmatprep.subr.mxu0 0.0
    %1234 = vmatpush2.msra.mxu0 0.0
    %1235 = vmatprep.subr.mxu0 0.0
    %1236 = vmatpush2.msra.mxu0 0.0
    %1237 = vmatprep.subr.mxu0 0.0
    %1238 = vmatpush2.msra.mxu0 0.0
    %1239 = vmatprep.mubr.f32.mxu0 0.0
    %1240 = vmatmul.mubr.f32.gmra.mxu0 %v1167
    %v1241 = vpop.f32.mrf.mxu0
    %v1242 = vadd.f32 0.0, %v1241
    %v1243 = vpop.f32.mrf.mxu0
    %v1244 = vadd.f32 0.0, %v1243
    %1245 = vdwg.mxu0
    %1246 = vmatprep.subr.mxu0 %v461
    %1247 = vmatpush1.msra.mxu0 %v460
    %1248 = vmatprep.subr.mxu0 %v457
    %1249 = vmatpush1.msra.mxu0 %v456
    %1250 = vmatprep.subr.mxu0 %v453
    %1251 = vmatpush1.msra.mxu0 %v452
    %1252 = vmatprep.subr.mxu0 %v449
    %1253 = vmatpush1.msra.mxu0 %v448
    %1254 = vmatprep.subr.mxu0 %v445
    %1255 = vmatpush1.msra.mxu0 %v444
    %1256 = vmatprep.subr.mxu0 %v441
    %1257 = vmatpush1.msra.mxu0 %v440
    %1258 = vmatprep.subr.mxu0 %v437
    %1259 = vmatpush1.msra.mxu0 %v436
    %1260 = vmatprep.subr.mxu0 %v433
    %1261 = vmatpush1.msra.mxu0 %v432
    %1262 = vmatprep.subr.mxu0 %v429
    %1263 = vmatpush1.msra.mxu0 %v428
    %1264 = vmatprep.subr.mxu0 %v425
    %1265 = vmatpush1.msra.mxu0 %v424
    %1266 = vmatprep.subr.mxu0 %v421
    %1267 = vmatpush1.msra.mxu0 %v420
    %1268 = vmatprep.subr.mxu0 %v417
    %1269 = vmatpush1.msra.mxu0 %v416
    %1270 = vmatprep.subr.mxu0 %v413
    %1271 = vmatpush1.msra.mxu0 %v412
    %1272 = vmatprep.subr.mxu0 %v409
    %1273 = vmatpush1.msra.mxu0 %v408
    %1274 = vmatprep.subr.mxu0 %v405
    %1275 = vmatpush1.msra.mxu0 %v404
    %1276 = vmatprep.subr.mxu0 %v401
    %1277 = vmatpush1.msra.mxu0 %v400
    %1278 = vmatprep.subr.mxu0 0.0
    %1279 = vmatpush2.msra.mxu0 0.0
    %1280 = vmatprep.subr.mxu0 0.0
    %1281 = vmatpush2.msra.mxu0 0.0
    %1282 = vmatprep.subr.mxu0 0.0
    %1283 = vmatpush2.msra.mxu0 0.0
    %1284 = vmatprep.subr.mxu0 0.0
    %1285 = vmatpush2.msra.mxu0 0.0
    %1286 = vmatprep.subr.mxu0 0.0
    %1287 = vmatpush2.msra.mxu0 0.0
    %1288 = vmatprep.subr.mxu0 0.0
    %1289 = vmatpush2.msra.mxu0 0.0
    %1290 = vmatprep.subr.mxu0 0.0
    %1291 = vmatpush2.msra.mxu0 0.0
    %1292 = vmatprep.subr.mxu0 0.0
    %1293 = vmatpush2.msra.mxu0 0.0
    %1294 = vmatprep.subr.mxu0 0.0
    %1295 = vmatpush2.msra.mxu0 0.0
    %1296 = vmatprep.subr.mxu0 0.0
    %1297 = vmatpush2.msra.mxu0 0.0
    %1298 = vmatprep.subr.mxu0 0.0
    %1299 = vmatpush2.msra.mxu0 0.0
    %1300 = vmatprep.subr.mxu0 0.0
    %1301 = vmatpush2.msra.mxu0 0.0
    %1302 = vmatprep.subr.mxu0 0.0
    %1303 = vmatpush2.msra.mxu0 0.0
    %1304 = vmatprep.subr.mxu0 0.0
    %1305 = vmatpush2.msra.mxu0 0.0
    %1306 = vmatprep.subr.mxu0 0.0
    %1307 = vmatpush2.msra.mxu0 0.0
    %1308 = vmatprep.subr.mxu0 0.0
    %1309 = vmatpush2.msra.mxu0 0.0
    %1310 = vmatprep.mubr.f32.mxu0 0.0
    %1311 = vmatmul.mubr.f32.gmra.mxu0 %v1167
    %v1312 = vpop.f32.mrf.mxu0
    %v1313 = vadd.f32 0.0, %v1312
    %v1314 = vpop.f32.mrf.mxu0
    %v1315 = vadd.f32 0.0, %v1314
    %1316 = vdwg.mxu0
    %v1317 = vadd.f32 %v1171, %v1242
    %v1318 = vadd.f32 %v1172, %v1244
    %v1319 = vadd.f32 %v1173, %v1313
    %v1320 = vadd.f32 %v1174, %v1315
    %v1321 = vxor.u32 %v1317, 2147483648
    %v1322 = vmul.f32 %v1321, 1.442695
    %v1323 = vpow.pop %v1322
    %v1324 = vadd.f32 %v1323, 1.0
    %v1325 = vrcp.pop %v1324
    %v1326 = vmul.f32 1.0, %v1325
    %v1327 = vxor.u32 %v1318, 2147483648
    %v1328 = vmul.f32 %v1327, 1.442695
    %v1329 = vpow.pop %v1328
    %v1330 = vadd.f32 %v1329, 1.0
    %v1331 = vrcp.pop %v1330
    %v1332 = vmul.f32 1.0, %v1331
    %v1333 = vtanh.pop %v1319
    %v1334 = vxor.u32 %v1320, 2147483648
    %v1335 = vmul.f32 %v1334, 1.442695
    %v1336 = vpow.pop %v1335
    %v1337 = vadd.f32 %v1336, 1.0
    %v1338 = vrcp.pop %v1337
    %v1339 = vmul.f32 1.0, %v1338
    %v1340 = vmul.f32 %v1332, %v1165
    %v1341 = vmul.f32 %v1326, %v1333
    %v1342 = vadd.f32 %v1340, %v1341
    %v1343 = vtanh.pop %v1342
    %v1344 = vmul.f32 %v1339, %v1343
    %s1345 = scalar_lea.vmem [#allocation3], 32
    %1346 = vst [vmem:[%s1345] sm:$0xff] %v1344
    %s1347 = scalar_lea.vmem [#allocation2], 160
    %v1348 = vld [vmem:[%s1347] sm:$0xff]
    %v1349 = vld [vmem:[%s1347 + $0x8] sm:$0xff]
    %v1350 = vld [vmem:[%s1347 + $0x10] sm:$0xff]
    %v1351 = vld [vmem:[%s1347 + $0x18] sm:$0xff]
    %1352 = vmatprep.subr.mxu0 %v459
    %1353 = vmatpush1.msra.mxu0 %v458
    %1354 = vmatprep.subr.mxu0 %v455
    %1355 = vmatpush1.msra.mxu0 %v454
    %1356 = vmatprep.subr.mxu0 %v451
    %1357 = vmatpush1.msra.mxu0 %v450
    %1358 = vmatprep.subr.mxu0 %v447
    %1359 = vmatpush1.msra.mxu0 %v446
    %1360 = vmatprep.subr.mxu0 %v443
    %1361 = vmatpush1.msra.mxu0 %v442
    %1362 = vmatprep.subr.mxu0 %v439
    %1363 = vmatpush1.msra.mxu0 %v438
    %1364 = vmatprep.subr.mxu0 %v435
    %1365 = vmatpush1.msra.mxu0 %v434
    %1366 = vmatprep.subr.mxu0 %v431
    %1367 = vmatpush1.msra.mxu0 %v430
    %1368 = vmatprep.subr.mxu0 %v427
    %1369 = vmatpush1.msra.mxu0 %v426
    %1370 = vmatprep.subr.mxu0 %v423
    %1371 = vmatpush1.msra.mxu0 %v422
    %1372 = vmatprep.subr.mxu0 %v419
    %1373 = vmatpush1.msra.mxu0 %v418
    %1374 = vmatprep.subr.mxu0 %v415
    %1375 = vmatpush1.msra.mxu0 %v414
    %1376 = vmatprep.subr.mxu0 %v411
    %1377 = vmatpush1.msra.mxu0 %v410
    %1378 = vmatprep.subr.mxu0 %v407
    %1379 = vmatpush1.msra.mxu0 %v406
    %1380 = vmatprep.subr.mxu0 %v403
    %1381 = vmatpush1.msra.mxu0 %v402
    %1382 = vmatprep.subr.mxu0 %v399
    %1383 = vmatpush1.msra.mxu0 %v398
    %1384 = vmatprep.subr.mxu0 0.0
    %1385 = vmatpush2.msra.mxu0 0.0
    %1386 = vmatprep.subr.mxu0 0.0
    %1387 = vmatpush2.msra.mxu0 0.0
    %1388 = vmatprep.subr.mxu0 0.0
    %1389 = vmatpush2.msra.mxu0 0.0
    %1390 = vmatprep.subr.mxu0 0.0
    %1391 = vmatpush2.msra.mxu0 0.0
    %1392 = vmatprep.subr.mxu0 0.0
    %1393 = vmatpush2.msra.mxu0 0.0
    %1394 = vmatprep.subr.mxu0 0.0
    %1395 = vmatpush2.msra.mxu0 0.0
    %1396 = vmatprep.subr.mxu0 0.0
    %1397 = vmatpush2.msra.mxu0 0.0
    %1398 = vmatprep.subr.mxu0 0.0
    %1399 = vmatpush2.msra.mxu0 0.0
    %1400 = vmatprep.subr.mxu0 0.0
    %1401 = vmatpush2.msra.mxu0 0.0
    %1402 = vmatprep.subr.mxu0 0.0
    %1403 = vmatpush2.msra.mxu0 0.0
    %1404 = vmatprep.subr.mxu0 0.0
    %1405 = vmatpush2.msra.mxu0 0.0
    %1406 = vmatprep.subr.mxu0 0.0
    %1407 = vmatpush2.msra.mxu0 0.0
    %1408 = vmatprep.subr.mxu0 0.0
    %1409 = vmatpush2.msra.mxu0 0.0
    %1410 = vmatprep.subr.mxu0 0.0
    %1411 = vmatpush2.msra.mxu0 0.0
    %1412 = vmatprep.subr.mxu0 0.0
    %1413 = vmatpush2.msra.mxu0 0.0
    %1414 = vmatprep.subr.mxu0 0.0
    %1415 = vmatpush2.msra.mxu0 0.0
    %1416 = vmatprep.mubr.f32.mxu0 0.0
    %1417 = vmatmul.mubr.f32.gmra.mxu0 %v1344
    %v1418 = vpop.f32.mrf.mxu0
    %v1419 = vadd.f32 0.0, %v1418
    %v1420 = vpop.f32.mrf.mxu0
    %v1421 = vadd.f32 0.0, %v1420
    %1422 = vdwg.mxu0
    %1423 = vmatprep.subr.mxu0 %v461
    %1424 = vmatpush1.msra.mxu0 %v460
    %1425 = vmatprep.subr.mxu0 %v457
    %1426 = vmatpush1.msra.mxu0 %v456
    %1427 = vmatprep.subr.mxu0 %v453
    %1428 = vmatpush1.msra.mxu0 %v452
    %1429 = vmatprep.subr.mxu0 %v449
    %1430 = vmatpush1.msra.mxu0 %v448
    %1431 = vmatprep.subr.mxu0 %v445
    %1432 = vmatpush1.msra.mxu0 %v444
    %1433 = vmatprep.subr.mxu0 %v441
    %1434 = vmatpush1.msra.mxu0 %v440
    %1435 = vmatprep.subr.mxu0 %v437
    %1436 = vmatpush1.msra.mxu0 %v436
    %1437 = vmatprep.subr.mxu0 %v433
    %1438 = vmatpush1.msra.mxu0 %v432
    %1439 = vmatprep.subr.mxu0 %v429
    %1440 = vmatpush1.msra.mxu0 %v428
    %1441 = vmatprep.subr.mxu0 %v425
    %1442 = vmatpush1.msra.mxu0 %v424
    %1443 = vmatprep.subr.mxu0 %v421
    %1444 = vmatpush1.msra.mxu0 %v420
    %1445 = vmatprep.subr.mxu0 %v417
    %1446 = vmatpush1.msra.mxu0 %v416
    %1447 = vmatprep.subr.mxu0 %v413
    %1448 = vmatpush1.msra.mxu0 %v412
    %1449 = vmatprep.subr.mxu0 %v409
    %1450 = vmatpush1.msra.mxu0 %v408
    %1451 = vmatprep.subr.mxu0 %v405
    %1452 = vmatpush1.msra.mxu0 %v404
    %1453 = vmatprep.subr.mxu0 %v401
    %1454 = vmatpush1.msra.mxu0 %v400
    %1455 = vmatprep.subr.mxu0 0.0
    %1456 = vmatpush2.msra.mxu0 0.0
    %1457 = vmatprep.subr.mxu0 0.0
    %1458 = vmatpush2.msra.mxu0 0.0
    %1459 = vmatprep.subr.mxu0 0.0
    %1460 = vmatpush2.msra.mxu0 0.0
    %1461 = vmatprep.subr.mxu0 0.0
    %1462 = vmatpush2.msra.mxu0 0.0
    %1463 = vmatprep.subr.mxu0 0.0
    %1464 = vmatpush2.msra.mxu0 0.0
    %1465 = vmatprep.subr.mxu0 0.0
    %1466 = vmatpush2.msra.mxu0 0.0
    %1467 = vmatprep.subr.mxu0 0.0
    %1468 = vmatpush2.msra.mxu0 0.0
    %1469 = vmatprep.subr.mxu0 0.0
    %1470 = vmatpush2.msra.mxu0 0.0
    %1471 = vmatprep.subr.mxu0 0.0
    %1472 = vmatpush2.msra.mxu0 0.0
    %1473 = vmatprep.subr.mxu0 0.0
    %1474 = vmatpush2.msra.mxu0 0.0
    %1475 = vmatprep.subr.mxu0 0.0
    %1476 = vmatpush2.msra.mxu0 0.0
    %1477 = vmatprep.subr.mxu0 0.0
    %1478 = vmatpush2.msra.mxu0 0.0
    %1479 = vmatprep.subr.mxu0 0.0
    %1480 = vmatpush2.msra.mxu0 0.0
    %1481 = vmatprep.subr.mxu0 0.0
    %1482 = vmatpush2.msra.mxu0 0.0
    %1483 = vmatprep.subr.mxu0 0.0
    %1484 = vmatpush2.msra.mxu0 0.0
    %1485 = vmatprep.subr.mxu0 0.0
    %1486 = vmatpush2.msra.mxu0 0.0
    %1487 = vmatprep.mubr.f32.mxu0 0.0
    %1488 = vmatmul.mubr.f32.gmra.mxu0 %v1344
    %v1489 = vpop.f32.mrf.mxu0
    %v1490 = vadd.f32 0.0, %v1489
    %v1491 = vpop.f32.mrf.mxu0
    %v1492 = vadd.f32 0.0, %v1491
    %1493 = vdwg.mxu0
    %v1494 = vadd.f32 %v1348, %v1419
    %v1495 = vadd.f32 %v1349, %v1421
    %v1496 = vadd.f32 %v1350, %v1490
    %v1497 = vadd.f32 %v1351, %v1492
    %v1498 = vxor.u32 %v1494, 2147483648
    %v1499 = vmul.f32 %v1498, 1.442695
    %v1500 = vpow.pop %v1499
    %v1501 = vadd.f32 %v1500, 1.0
    %v1502 = vrcp.pop %v1501
    %v1503 = vmul.f32 1.0, %v1502
    %v1504 = vxor.u32 %v1495, 2147483648
    %v1505 = vmul.f32 %v1504, 1.442695
    %v1506 = vpow.pop %v1505
    %v1507 = vadd.f32 %v1506, 1.0
    %v1508 = vrcp.pop %v1507
    %v1509 = vmul.f32 1.0, %v1508
    %v1510 = vtanh.pop %v1496
    %v1511 = vxor.u32 %v1497, 2147483648
    %v1512 = vmul.f32 %v1511, 1.442695
    %v1513 = vpow.pop %v1512
    %v1514 = vadd.f32 %v1513, 1.0
    %v1515 = vrcp.pop %v1514
    %v1516 = vmul.f32 1.0, %v1515
    %v1517 = vmul.f32 %v1509, %v1342
    %v1518 = vmul.f32 %v1503, %v1510
    %v1519 = vadd.f32 %v1517, %v1518
    %v1520 = vtanh.pop %v1519
    %v1521 = vmul.f32 %v1516, %v1520
    %s1522 = scalar_lea.vmem [#allocation3], 40
    %1523 = vst [vmem:[%s1522] sm:$0xff] %v1521
    %s1524 = scalar_lea.vmem [#allocation2], 192
    %v1525 = vld [vmem:[%s1524] sm:$0xff]
    %v1526 = vld [vmem:[%s1524 + $0x8] sm:$0xff]
    %v1527 = vld [vmem:[%s1524 + $0x10] sm:$0xff]
    %v1528 = vld [vmem:[%s1524 + $0x18] sm:$0xff]
    %1529 = vmatprep.subr.mxu0 %v459
    %1530 = vmatpush1.msra.mxu0 %v458
    %1531 = vmatprep.subr.mxu0 %v455
    %1532 = vmatpush1.msra.mxu0 %v454
    %1533 = vmatprep.subr.mxu0 %v451
    %1534 = vmatpush1.msra.mxu0 %v450
    %1535 = vmatprep.subr.mxu0 %v447
    %1536 = vmatpush1.msra.mxu0 %v446
    %1537 = vmatprep.subr.mxu0 %v443
    %1538 = vmatpush1.msra.mxu0 %v442
    %1539 = vmatprep.subr.mxu0 %v439
    %1540 = vmatpush1.msra.mxu0 %v438
    %1541 = vmatprep.subr.mxu0 %v435
    %1542 = vmatpush1.msra.mxu0 %v434
    %1543 = vmatprep.subr.mxu0 %v431
    %1544 = vmatpush1.msra.mxu0 %v430
    %1545 = vmatprep.subr.mxu0 %v427
    %1546 = vmatpush1.msra.mxu0 %v426
    %1547 = vmatprep.subr.mxu0 %v423
    %1548 = vmatpush1.msra.mxu0 %v422
    %1549 = vmatprep.subr.mxu0 %v419
    %1550 = vmatpush1.msra.mxu0 %v418
    %1551 = vmatprep.subr.mxu0 %v415
    %1552 = vmatpush1.msra.mxu0 %v414
    %1553 = vmatprep.subr.mxu0 %v411
    %1554 = vmatpush1.msra.mxu0 %v410
    %1555 = vmatprep.subr.mxu0 %v407
    %1556 = vmatpush1.msra.mxu0 %v406
    %1557 = vmatprep.subr.mxu0 %v403
    %1558 = vmatpush1.msra.mxu0 %v402
    %1559 = vmatprep.subr.mxu0 %v399
    %1560 = vmatpush1.msra.mxu0 %v398
    %1561 = vmatprep.subr.mxu0 0.0
    %1562 = vmatpush2.msra.mxu0 0.0
    %1563 = vmatprep.subr.mxu0 0.0
    %1564 = vmatpush2.msra.mxu0 0.0
    %1565 = vmatprep.subr.mxu0 0.0
    %1566 = vmatpush2.msra.mxu0 0.0
    %1567 = vmatprep.subr.mxu0 0.0
    %1568 = vmatpush2.msra.mxu0 0.0
    %1569 = vmatprep.subr.mxu0 0.0
    %1570 = vmatpush2.msra.mxu0 0.0
    %1571 = vmatprep.subr.mxu0 0.0
    %1572 = vmatpush2.msra.mxu0 0.0
    %1573 = vmatprep.subr.mxu0 0.0
    %1574 = vmatpush2.msra.mxu0 0.0
    %1575 = vmatprep.subr.mxu0 0.0
    %1576 = vmatpush2.msra.mxu0 0.0
    %1577 = vmatprep.subr.mxu0 0.0
    %1578 = vmatpush2.msra.mxu0 0.0
    %1579 = vmatprep.subr.mxu0 0.0
    %1580 = vmatpush2.msra.mxu0 0.0
    %1581 = vmatprep.subr.mxu0 0.0
    %1582 = vmatpush2.msra.mxu0 0.0
    %1583 = vmatprep.subr.mxu0 0.0
    %1584 = vmatpush2.msra.mxu0 0.0
    %1585 = vmatprep.subr.mxu0 0.0
    %1586 = vmatpush2.msra.mxu0 0.0
    %1587 = vmatprep.subr.mxu0 0.0
    %1588 = vmatpush2.msra.mxu0 0.0
    %1589 = vmatprep.subr.mxu0 0.0
    %1590 = vmatpush2.msra.mxu0 0.0
    %1591 = vmatprep.subr.mxu0 0.0
    %1592 = vmatpush2.msra.mxu0 0.0
    %1593 = vmatprep.mubr.f32.mxu0 0.0
    %1594 = vmatmul.mubr.f32.gmra.mxu0 %v1521
    %v1595 = vpop.f32.mrf.mxu0
    %v1596 = vadd.f32 0.0, %v1595
    %v1597 = vpop.f32.mrf.mxu0
    %v1598 = vadd.f32 0.0, %v1597
    %1599 = vdwg.mxu0
    %1600 = vmatprep.subr.mxu0 %v461
    %1601 = vmatpush1.msra.mxu0 %v460
    %1602 = vmatprep.subr.mxu0 %v457
    %1603 = vmatpush1.msra.mxu0 %v456
    %1604 = vmatprep.subr.mxu0 %v453
    %1605 = vmatpush1.msra.mxu0 %v452
    %1606 = vmatprep.subr.mxu0 %v449
    %1607 = vmatpush1.msra.mxu0 %v448
    %1608 = vmatprep.subr.mxu0 %v445
    %1609 = vmatpush1.msra.mxu0 %v444
    %1610 = vmatprep.subr.mxu0 %v441
    %1611 = vmatpush1.msra.mxu0 %v440
    %1612 = vmatprep.subr.mxu0 %v437
    %1613 = vmatpush1.msra.mxu0 %v436
    %1614 = vmatprep.subr.mxu0 %v433
    %1615 = vmatpush1.msra.mxu0 %v432
    %1616 = vmatprep.subr.mxu0 %v429
    %1617 = vmatpush1.msra.mxu0 %v428
    %1618 = vmatprep.subr.mxu0 %v425
    %1619 = vmatpush1.msra.mxu0 %v424
    %1620 = vmatprep.subr.mxu0 %v421
    %1621 = vmatpush1.msra.mxu0 %v420
    %1622 = vmatprep.subr.mxu0 %v417
    %1623 = vmatpush1.msra.mxu0 %v416
    %1624 = vmatprep.subr.mxu0 %v413
    %1625 = vmatpush1.msra.mxu0 %v412
    %1626 = vmatprep.subr.mxu0 %v409
    %1627 = vmatpush1.msra.mxu0 %v408
    %1628 = vmatprep.subr.mxu0 %v405
    %1629 = vmatpush1.msra.mxu0 %v404
    %1630 = vmatprep.subr.mxu0 %v401
    %1631 = vmatpush1.msra.mxu0 %v400
    %1632 = vmatprep.subr.mxu0 0.0
    %1633 = vmatpush2.msra.mxu0 0.0
    %1634 = vmatprep.subr.mxu0 0.0
    %1635 = vmatpush2.msra.mxu0 0.0
    %1636 = vmatprep.subr.mxu0 0.0
    %1637 = vmatpush2.msra.mxu0 0.0
    %1638 = vmatprep.subr.mxu0 0.0
    %1639 = vmatpush2.msra.mxu0 0.0
    %1640 = vmatprep.subr.mxu0 0.0
    %1641 = vmatpush2.msra.mxu0 0.0
    %1642 = vmatprep.subr.mxu0 0.0
    %1643 = vmatpush2.msra.mxu0 0.0
    %1644 = vmatprep.subr.mxu0 0.0
    %1645 = vmatpush2.msra.mxu0 0.0
    %1646 = vmatprep.subr.mxu0 0.0
    %1647 = vmatpush2.msra.mxu0 0.0
    %1648 = vmatprep.subr.mxu0 0.0
    %1649 = vmatpush2.msra.mxu0 0.0
    %1650 = vmatprep.subr.mxu0 0.0
    %1651 = vmatpush2.msra.mxu0 0.0
    %1652 = vmatprep.subr.mxu0 0.0
    %1653 = vmatpush2.msra.mxu0 0.0
    %1654 = vmatprep.subr.mxu0 0.0
    %1655 = vmatpush2.msra.mxu0 0.0
    %1656 = vmatprep.subr.mxu0 0.0
    %1657 = vmatpush2.msra.mxu0 0.0
    %1658 = vmatprep.subr.mxu0 0.0
    %1659 = vmatpush2.msra.mxu0 0.0
    %1660 = vmatprep.subr.mxu0 0.0
    %1661 = vmatpush2.msra.mxu0 0.0
    %1662 = vmatprep.subr.mxu0 0.0
    %1663 = vmatpush2.msra.mxu0 0.0
    %1664 = vmatprep.mubr.f32.mxu0 0.0
    %1665 = vmatmul.mubr.f32.gmra.mxu0 %v1521
    %v1666 = vpop.f32.mrf.mxu0
    %v1667 = vadd.f32 0.0, %v1666
    %v1668 = vpop.f32.mrf.mxu0
    %v1669 = vadd.f32 0.0, %v1668
    %1670 = vdwg.mxu0
    %v1671 = vadd.f32 %v1525, %v1596
    %v1672 = vadd.f32 %v1526, %v1598
    %v1673 = vadd.f32 %v1527, %v1667
    %v1674 = vadd.f32 %v1528, %v1669
    %v1675 = vxor.u32 %v1671, 2147483648
    %v1676 = vmul.f32 %v1675, 1.442695
    %v1677 = vpow.pop %v1676
    %v1678 = vadd.f32 %v1677, 1.0
    %v1679 = vrcp.pop %v1678
    %v1680 = vmul.f32 1.0, %v1679
    %v1681 = vxor.u32 %v1672, 2147483648
    %v1682 = vmul.f32 %v1681, 1.442695
    %v1683 = vpow.pop %v1682
    %v1684 = vadd.f32 %v1683, 1.0
    %v1685 = vrcp.pop %v1684
    %v1686 = vmul.f32 1.0, %v1685
    %v1687 = vtanh.pop %v1673
    %v1688 = vxor.u32 %v1674, 2147483648
    %v1689 = vmul.f32 %v1688, 1.442695
    %v1690 = vpow.pop %v1689
    %v1691 = vadd.f32 %v1690, 1.0
    %v1692 = vrcp.pop %v1691
    %v1693 = vmul.f32 1.0, %v1692
    %v1694 = vmul.f32 %v1686, %v1519
    %v1695 = vmul.f32 %v1680, %v1687
    %v1696 = vadd.f32 %v1694, %v1695
    %v1697 = vtanh.pop %v1696
    %v1698 = vmul.f32 %v1693, %v1697
    %s1699 = scalar_lea.vmem [#allocation3], 48
    %1700 = vst [vmem:[%s1699] sm:$0xff] %v1698
    %s1701 = scalar_lea.vmem [#allocation2], 224
    %v1702 = vld [vmem:[%s1701] sm:$0xff]
    %v1703 = vld [vmem:[%s1701 + $0x8] sm:$0xff]
    %v1704 = vld [vmem:[%s1701 + $0x10] sm:$0xff]
    %v1705 = vld [vmem:[%s1701 + $0x18] sm:$0xff]
    %1706 = vmatprep.subr.mxu0 %v459
    %1707 = vmatpush1.msra.mxu0 %v458
    %1708 = vmatprep.subr.mxu0 %v455
    %1709 = vmatpush1.msra.mxu0 %v454
    %1710 = vmatprep.subr.mxu0 %v451
    %1711 = vmatpush1.msra.mxu0 %v450
    %1712 = vmatprep.subr.mxu0 %v447
    %1713 = vmatpush1.msra.mxu0 %v446
    %1714 = vmatprep.subr.mxu0 %v443
    %1715 = vmatpush1.msra.mxu0 %v442
    %1716 = vmatprep.subr.mxu0 %v439
    %1717 = vmatpush1.msra.mxu0 %v438
    %1718 = vmatprep.subr.mxu0 %v435
    %1719 = vmatpush1.msra.mxu0 %v434
    %1720 = vmatprep.subr.mxu0 %v431
    %1721 = vmatpush1.msra.mxu0 %v430
    %1722 = vmatprep.subr.mxu0 %v427
    %1723 = vmatpush1.msra.mxu0 %v426
    %1724 = vmatprep.subr.mxu0 %v423
    %1725 = vmatpush1.msra.mxu0 %v422
    %1726 = vmatprep.subr.mxu0 %v419
    %1727 = vmatpush1.msra.mxu0 %v418
    %1728 = vmatprep.subr.mxu0 %v415
    %1729 = vmatpush1.msra.mxu0 %v414
    %1730 = vmatprep.subr.mxu0 %v411
    %1731 = vmatpush1.msra.mxu0 %v410
    %1732 = vmatprep.subr.mxu0 %v407
    %1733 = vmatpush1.msra.mxu0 %v406
    %1734 = vmatprep.subr.mxu0 %v403
    %1735 = vmatpush1.msra.mxu0 %v402
    %1736 = vmatprep.subr.mxu0 %v399
    %1737 = vmatpush1.msra.mxu0 %v398
    %1738 = vmatprep.subr.mxu0 0.0
    %1739 = vmatpush2.msra.mxu0 0.0
    %1740 = vmatprep.subr.mxu0 0.0
    %1741 = vmatpush2.msra.mxu0 0.0
    %1742 = vmatprep.subr.mxu0 0.0
    %1743 = vmatpush2.msra.mxu0 0.0
    %1744 = vmatprep.subr.mxu0 0.0
    %1745 = vmatpush2.msra.mxu0 0.0
    %1746 = vmatprep.subr.mxu0 0.0
    %1747 = vmatpush2.msra.mxu0 0.0
    %1748 = vmatprep.subr.mxu0 0.0
    %1749 = vmatpush2.msra.mxu0 0.0
    %1750 = vmatprep.subr.mxu0 0.0
    %1751 = vmatpush2.msra.mxu0 0.0
    %1752 = vmatprep.subr.mxu0 0.0
    %1753 = vmatpush2.msra.mxu0 0.0
    %1754 = vmatprep.subr.mxu0 0.0
    %1755 = vmatpush2.msra.mxu0 0.0
    %1756 = vmatprep.subr.mxu0 0.0
    %1757 = vmatpush2.msra.mxu0 0.0
    %1758 = vmatprep.subr.mxu0 0.0
    %1759 = vmatpush2.msra.mxu0 0.0
    %1760 = vmatprep.subr.mxu0 0.0
    %1761 = vmatpush2.msra.mxu0 0.0
    %1762 = vmatprep.subr.mxu0 0.0
    %1763 = vmatpush2.msra.mxu0 0.0
    %1764 = vmatprep.subr.mxu0 0.0
    %1765 = vmatpush2.msra.mxu0 0.0
    %1766 = vmatprep.subr.mxu0 0.0
    %1767 = vmatpush2.msra.mxu0 0.0
    %1768 = vmatprep.subr.mxu0 0.0
    %1769 = vmatpush2.msra.mxu0 0.0
    %1770 = vmatprep.mubr.f32.mxu0 0.0
    %1771 = vmatmul.mubr.f32.gmra.mxu0 %v1698
    %v1772 = vpop.f32.mrf.mxu0
    %v1773 = vadd.f32 0.0, %v1772
    %v1774 = vpop.f32.mrf.mxu0
    %v1775 = vadd.f32 0.0, %v1774
    %1776 = vdwg.mxu0
    %1777 = vmatprep.subr.mxu0 %v461
    %1778 = vmatpush1.msra.mxu0 %v460
    %1779 = vmatprep.subr.mxu0 %v457
    %1780 = vmatpush1.msra.mxu0 %v456
    %1781 = vmatprep.subr.mxu0 %v453
    %1782 = vmatpush1.msra.mxu0 %v452
    %1783 = vmatprep.subr.mxu0 %v449
    %1784 = vmatpush1.msra.mxu0 %v448
    %1785 = vmatprep.subr.mxu0 %v445
    %1786 = vmatpush1.msra.mxu0 %v444
    %1787 = vmatprep.subr.mxu0 %v441
    %1788 = vmatpush1.msra.mxu0 %v440
    %1789 = vmatprep.subr.mxu0 %v437
    %1790 = vmatpush1.msra.mxu0 %v436
    %1791 = vmatprep.subr.mxu0 %v433
    %1792 = vmatpush1.msra.mxu0 %v432
    %1793 = vmatprep.subr.mxu0 %v429
    %1794 = vmatpush1.msra.mxu0 %v428
    %1795 = vmatprep.subr.mxu0 %v425
    %1796 = vmatpush1.msra.mxu0 %v424
    %1797 = vmatprep.subr.mxu0 %v421
    %1798 = vmatpush1.msra.mxu0 %v420
    %1799 = vmatprep.subr.mxu0 %v417
    %1800 = vmatpush1.msra.mxu0 %v416
    %1801 = vmatprep.subr.mxu0 %v413
    %1802 = vmatpush1.msra.mxu0 %v412
    %1803 = vmatprep.subr.mxu0 %v409
    %1804 = vmatpush1.msra.mxu0 %v408
    %1805 = vmatprep.subr.mxu0 %v405
    %1806 = vmatpush1.msra.mxu0 %v404
    %1807 = vmatprep.subr.mxu0 %v401
    %1808 = vmatpush1.msra.mxu0 %v400
    %1809 = vmatprep.subr.mxu0 0.0
    %1810 = vmatpush2.msra.mxu0 0.0
    %1811 = vmatprep.subr.mxu0 0.0
    %1812 = vmatpush2.msra.mxu0 0.0
    %1813 = vmatprep.subr.mxu0 0.0
    %1814 = vmatpush2.msra.mxu0 0.0
    %1815 = vmatprep.subr.mxu0 0.0
    %1816 = vmatpush2.msra.mxu0 0.0
    %1817 = vmatprep.subr.mxu0 0.0
    %1818 = vmatpush2.msra.mxu0 0.0
    %1819 = vmatprep.subr.mxu0 0.0
    %1820 = vmatpush2.msra.mxu0 0.0
    %1821 = vmatprep.subr.mxu0 0.0
    %1822 = vmatpush2.msra.mxu0 0.0
    %1823 = vmatprep.subr.mxu0 0.0
    %1824 = vmatpush2.msra.mxu0 0.0
    %1825 = vmatprep.subr.mxu0 0.0
    %1826 = vmatpush2.msra.mxu0 0.0
    %1827 = vmatprep.subr.mxu0 0.0
    %1828 = vmatpush2.msra.mxu0 0.0
    %1829 = vmatprep.subr.mxu0 0.0
    %1830 = vmatpush2.msra.mxu0 0.0
    %1831 = vmatprep.subr.mxu0 0.0
    %1832 = vmatpush2.msra.mxu0 0.0
    %1833 = vmatprep.subr.mxu0 0.0
    %1834 = vmatpush2.msra.mxu0 0.0
    %1835 = vmatprep.subr.mxu0 0.0
    %1836 = vmatpush2.msra.mxu0 0.0
    %1837 = vmatprep.subr.mxu0 0.0
    %1838 = vmatpush2.msra.mxu0 0.0
    %1839 = vmatprep.subr.mxu0 0.0
    %1840 = vmatpush2.msra.mxu0 0.0
    %1841 = vmatprep.mubr.f32.mxu0 0.0
    %1842 = vmatmul.mubr.f32.gmra.mxu0 %v1698
    %v1843 = vpop.f32.mrf.mxu0
    %v1844 = vadd.f32 0.0, %v1843
    %v1845 = vpop.f32.mrf.mxu0
    %v1846 = vadd.f32 0.0, %v1845
    %1847 = vdwg.mxu0
    %v1848 = vadd.f32 %v1702, %v1773
    %v1849 = vadd.f32 %v1703, %v1775
    %v1850 = vadd.f32 %v1704, %v1844
    %v1851 = vadd.f32 %v1705, %v1846
    %v1852 = vxor.u32 %v1848, 2147483648
    %v1853 = vmul.f32 %v1852, 1.442695
    %v1854 = vpow.pop %v1853
    %v1855 = vadd.f32 %v1854, 1.0
    %v1856 = vrcp.pop %v1855
    %v1857 = vmul.f32 1.0, %v1856
    %v1858 = vxor.u32 %v1849, 2147483648
    %v1859 = vmul.f32 %v1858, 1.442695
    %v1860 = vpow.pop %v1859
    %v1861 = vadd.f32 %v1860, 1.0
    %v1862 = vrcp.pop %v1861
    %v1863 = vmul.f32 1.0, %v1862
    %v1864 = vtanh.pop %v1850
    %v1865 = vxor.u32 %v1851, 2147483648
    %v1866 = vmul.f32 %v1865, 1.442695
    %v1867 = vpow.pop %v1866
    %v1868 = vadd.f32 %v1867, 1.0
    %v1869 = vrcp.pop %v1868
    %v1870 = vmul.f32 1.0, %v1869
    %v1871 = vmul.f32 %v1863, %v1696
    %v1872 = vmul.f32 %v1857, %v1864
    %v1873 = vadd.f32 %v1871, %v1872
    %v1874 = vtanh.pop %v1873
    %v1875 = vmul.f32 %v1870, %v1874
    %s1876 = scalar_lea.vmem [#allocation3], 56
    %1877 = vst [vmem:[%s1876] sm:$0xff] %v1875
    %1878 = vst [vmem:[%s9] sm:$0xff] %v1875
    %1879 = vst [vmem:[%s10] sm:$0xff] %v1873
    %v1880 = vld [vmem:[#allocation3] sm:$0xff]
    %v1881 = vld [vmem:[#allocation3 + $0x8] sm:$0xff]
    %v1882 = vld [vmem:[#allocation3 + $0x10] sm:$0xff]
    %v1883 = vld [vmem:[#allocation3 + $0x18] sm:$0xff]
    %v1884 = vld [vmem:[#allocation3 + $0x20] sm:$0xff]
    %v1885 = vld [vmem:[#allocation3 + $0x28] sm:$0xff]
    %v1886 = vld [vmem:[#allocation3 + $0x30] sm:$0xff]
    %v1887 = vld [vmem:[#allocation3 + $0x38] sm:$0xff]
    %v1888 = vld [vmem:[%s6] sm:$0xff]
    %v1889 = vld [vmem:[%s6 + $0x8] sm:$0xff]
    %v1890 = vld [vmem:[%s6 + $0x10] sm:$0xff]
    %v1891 = vld [vmem:[%s6 + $0x18] sm:$0xff]
    %v1892 = vld [vmem:[%s6 + $0x20] sm:$0xff]
    %v1893 = vld [vmem:[%s6 + $0x28] sm:$0xff]
    %v1894 = vld [vmem:[%s6 + $0x30] sm:$0xff]
    %v1895 = vld [vmem:[%s6 + $0x38] sm:$0xff]
    %v1896 = vld [vmem:[%s6 + $0x40] sm:$0xff]
    %v1897 = vld [vmem:[%s6 + $0x48] sm:$0xff]
    %v1898 = vld [vmem:[%s6 + $0x50] sm:$0xff]
    %v1899 = vld [vmem:[%s6 + $0x58] sm:$0xff]
    %v1900 = vld [vmem:[%s6 + $0x60] sm:$0xff]
    %v1901 = vld [vmem:[%s6 + $0x68] sm:$0xff]
    %v1902 = vld [vmem:[%s6 + $0x70] sm:$0xff]
    %v1903 = vld [vmem:[%s6 + $0x78] sm:$0xff]
    %v1904 = vld [vmem:[%s7] sm:$0x1]
    %v1906 = vlaneseq
    %v1907 = vshrl.u32 %v1906, 7
    %v1908 = vsub.s32 0, %v1907
    %v1909 = vrot.slane %v1904, %v1908
    %1911 = vmatprep.subr.mxu0 0.0
    %1912 = vmatpush1.msra.mxu0 %v1903
    %1913 = vmatprep.subr.mxu0 0.0
    %1914 = vmatpush1.msra.mxu0 %v1902
    %1915 = vmatprep.subr.mxu0 0.0
    %1916 = vmatpush1.msra.mxu0 %v1901
    %1917 = vmatprep.subr.mxu0 0.0
    %1918 = vmatpush1.msra.mxu0 %v1900
    %1919 = vmatprep.subr.mxu0 0.0
    %1920 = vmatpush1.msra.mxu0 %v1899
    %1921 = vmatprep.subr.mxu0 0.0
    %1922 = vmatpush1.msra.mxu0 %v1898
    %1923 = vmatprep.subr.mxu0 0.0
    %1924 = vmatpush1.msra.mxu0 %v1897
    %1925 = vmatprep.subr.mxu0 0.0
    %1926 = vmatpush1.msra.mxu0 %v1896
    %1927 = vmatprep.subr.mxu0 0.0
    %1928 = vmatpush1.msra.mxu0 %v1895
    %1929 = vmatprep.subr.mxu0 0.0
    %1930 = vmatpush1.msra.mxu0 %v1894
    %1931 = vmatprep.subr.mxu0 0.0
    %1932 = vmatpush1.msra.mxu0 %v1893
    %1933 = vmatprep.subr.mxu0 0.0
    %1934 = vmatpush1.msra.mxu0 %v1892
    %1935 = vmatprep.subr.mxu0 0.0
    %1936 = vmatpush1.msra.mxu0 %v1891
    %1937 = vmatprep.subr.mxu0 0.0
    %1938 = vmatpush1.msra.mxu0 %v1890
    %1939 = vmatprep.subr.mxu0 0.0
    %1940 = vmatpush1.msra.mxu0 %v1889
    %1941 = vmatprep.subr.mxu0 0.0
    %1942 = vmatpush1.msra.mxu0 %v1888
    %1943 = vmatprep.subr.mxu0 0.0
    %1944 = vmatpush2.msra.mxu0 0.0
    %1945 = vmatprep.subr.mxu0 0.0
    %1946 = vmatpush2.msra.mxu0 0.0
    %1947 = vmatprep.subr.mxu0 0.0
    %1948 = vmatpush2.msra.mxu0 0.0
    %1949 = vmatprep.subr.mxu0 0.0
    %1950 = vmatpush2.msra.mxu0 0.0
    %1951 = vmatprep.subr.mxu0 0.0
    %1952 = vmatpush2.msra.mxu0 0.0
    %1953 = vmatprep.subr.mxu0 0.0
    %1954 = vmatpush2.msra.mxu0 0.0
    %1955 = vmatprep.subr.mxu0 0.0
    %1956 = vmatpush2.msra.mxu0 0.0
    %1957 = vmatprep.subr.mxu0 0.0
    %1958 = vmatpush2.msra.mxu0 0.0
    %1959 = vmatprep.subr.mxu0 0.0
    %1960 = vmatpush2.msra.mxu0 0.0
    %1961 = vmatprep.subr.mxu0 0.0
    %1962 = vmatpush2.msra.mxu0 0.0
    %1963 = vmatprep.subr.mxu0 0.0
    %1964 = vmatpush2.msra.mxu0 0.0
    %1965 = vmatprep.subr.mxu0 0.0
    %1966 = vmatpush2.msra.mxu0 0.0
    %1967 = vmatprep.subr.mxu0 0.0
    %1968 = vmatpush2.msra.mxu0 0.0
    %1969 = vmatprep.subr.mxu0 0.0
    %1970 = vmatpush2.msra.mxu0 0.0
    %1971 = vmatprep.subr.mxu0 0.0
    %1972 = vmatpush2.msra.mxu0 0.0
    %1973 = vmatprep.subr.mxu0 0.0
    %1974 = vmatpush2.msra.mxu0 0.0
    %1975 = vmatprep.mubr.f32.mxu0 0.0
    %1976 = vmatmul.mubr.f32.gmra.mxu0 %v1880
    %v1977 = vpop.f32.mrf.mxu0
    %v1978 = vadd.f32 %v1909, %v1977
    %v1979 = vpop.f32.mrf.mxu0
    %1980 = vmatprep.mubr.f32.mxu0 0.0
    %1981 = vmatmul.mubr.f32.gmra.mxu0 %v1881
    %v1982 = vpop.f32.mrf.mxu0
    %v1983 = vadd.f32 %v1909, %v1982
    %v1984 = vpop.f32.mrf.mxu0
    %1985 = vmatprep.mubr.f32.mxu0 0.0
    %1986 = vmatmul.mubr.f32.gmra.mxu0 %v1882
    %v1987 = vpop.f32.mrf.mxu0
    %v1988 = vadd.f32 %v1909, %v1987
    %v1989 = vpop.f32.mrf.mxu0
    %1990 = vmatprep.mubr.f32.mxu0 0.0
    %1991 = vmatmul.mubr.f32.gmra.mxu0 %v1883
    %v1992 = vpop.f32.mrf.mxu0
    %v1993 = vadd.f32 %v1909, %v1992
    %v1994 = vpop.f32.mrf.mxu0
    %1995 = vmatprep.mubr.f32.mxu0 0.0
    %1996 = vmatmul.mubr.f32.gmra.mxu0 %v1884
    %v1997 = vpop.f32.mrf.mxu0
    %v1998 = vadd.f32 %v1909, %v1997
    %v1999 = vpop.f32.mrf.mxu0
    %2000 = vmatprep.mubr.f32.mxu0 0.0
    %2001 = vmatmul.mubr.f32.gmra.mxu0 %v1885
    %v2002 = vpop.f32.mrf.mxu0
    %v2003 = vadd.f32 %v1909, %v2002
    %v2004 = vpop.f32.mrf.mxu0
    %2005 = vmatprep.mubr.f32.mxu0 0.0
    %2006 = vmatmul.mubr.f32.gmra.mxu0 %v1886
    %v2007 = vpop.f32.mrf.mxu0
    %v2008 = vadd.f32 %v1909, %v2007
    %v2009 = vpop.f32.mrf.mxu0
    %2010 = vmatprep.mubr.f32.mxu0 0.0
    %2011 = vmatmul.mubr.f32.gmra.mxu0 %v1887
    %v2012 = vpop.f32.mrf.mxu0
    %v2013 = vadd.f32 %v1909, %v2012
    %v2014 = vpop.f32.mrf.mxu0
    %2015 = vdwg.mxu0
    %2016 = vst [vmem:[%s8] sm:$0xff] %v1978
    %2017 = vst [vmem:[%s8 + $0x8] sm:$0xff] %v1983
    %2018 = vst [vmem:[%s8 + $0x10] sm:$0xff] %v1988
    %2019 = vst [vmem:[%s8 + $0x18] sm:$0xff] %v1993
    %2020 = vst [vmem:[%s8 + $0x20] sm:$0xff] %v1998
    %2021 = vst [vmem:[%s8 + $0x28] sm:$0xff] %v2003
    %2022 = vst [vmem:[%s8 + $0x30] sm:$0xff] %v2008
    %2023 = vst [vmem:[%s8 + $0x38] sm:$0xff] %v2013
    // Predicated region
    $region38: #{_char_decoder_forward_impl.1} parent=1 // pred_check
      _
    $region39: #{_char_decoder_forward_impl.1} parent=1 // pred_check_branch
      %2025 = sbr.rel (0) target = $region41
    $region40: #{_char_decoder_forward_impl.1} parent=1 // pred_region
      _
    $region41: #{_char_decoder_forward_impl.1} parent=1 // pred_fallthru
      _
    // Predicated region
    $region42: #{_char_decoder_forward_impl.1} parent=1 // pred_check
      _
    $region43: #{_char_decoder_forward_impl.1} parent=1 // pred_check_branch
      %2027 = sbr.rel (0) target = $region45
    $region44: #{_char_decoder_forward_impl.1} parent=1 // pred_region
      _
    $region45: #{_char_decoder_forward_impl.1} parent=1 // pred_fallthru
      _
    // Predicated region
    $region46: #{_char_decoder_forward_impl.1} parent=1 // pred_check
      _
    $region47: #{_char_decoder_forward_impl.1} parent=1 // pred_check_branch
      %2029 = sbr.rel (0) target = $region49
    $region48: #{_char_decoder_forward_impl.1} parent=1 // pred_region
      _
    $region49: #{_char_decoder_forward_impl.1} parent=1 // pred_fallthru
      _
    // Predicated region
    $region50: #{_char_decoder_forward_impl.1} parent=1 // pred_check
      _
    $region51: #{_char_decoder_forward_impl.1} parent=1 // pred_check_branch
      %2031 = sbr.rel (0) target = $region53
    $region52: #{_char_decoder_forward_impl.1} parent=1 // pred_region
      _
    $region53: #{_char_decoder_forward_impl.1} parent=1 // pred_fallthru
      _
    // Predicated region
    $region54: #{_char_decoder_forward_impl.1} parent=1 // pred_check
      _
    $region55: #{_char_decoder_forward_impl.1} parent=1 // pred_check_branch
      %2033 = sbr.rel (0) target = $region57
    $region56: #{_char_decoder_forward_impl.1} parent=1 // pred_region
      _
    $region57: #{_char_decoder_forward_impl.1} parent=1 // pred_fallthru
      _
    // Predicated region
    $region58: #{_char_decoder_forward_impl.1} parent=1 // pred_check
      _
    $region59: #{_char_decoder_forward_impl.1} parent=1 // pred_check_branch
      %2035 = sbr.rel (0) target = $region61
    $region60: #{_char_decoder_forward_impl.1} parent=1 // pred_region
      _
    $region61: #{_char_decoder_forward_impl.1} parent=1 // pred_fallthru
      _
    %2036 = vsyncpa [#allocation5], 1

</llo_original>
